<compile_context>
chip_gen: v5e
topology: v5e:2x2
jax: 0.10.0
libtpu: 0.0.40
codegen_flags: <defaults>
</compile_context>

<pallas_src>
import functools

import jax
import jax.numpy as jnp
import numpy as np
from jax.experimental import pallas as pl
from jax.experimental.pallas import tpu as pltpu

_NEG = -1e30  # finite "minus infinity" for masking invalid conv positions


def _round_up(x, m):
    return ((x + m - 1) // m) * m


def _textcnn_kernel(emb_ref, wall_ref, mask_ref, wc_ref, bc_ref, out_ref,
                    conv_ref, pooled_ref, *, num_taps, tile_batch, seq_tile):
    """One batch tile (TB rows) per grid step.

    emb_ref    : (TB*L_pad, E)        flattened embeddings, compute dtype (bf16)
    wall_ref   : (kmax, E, CS_PAD)    per-tap conv weights, all windows stacked
    mask_ref   : (TB*L_pad, CS_PAD)   0 on valid positions, -1e30 elsewhere
    wc_ref     : (CS_PAD, NC_PAD)     classifier weight (padded, transposed)
    bc_ref     : (1, NC_PAD)          classifier bias (+ folded conv biases)
    out_ref    : (TB, NC_PAD)         logits for this batch tile
    conv_ref   : (TB*L_pad + 8, CS_PAD) f32 scratch for tap-shifted accumulation
    pooled_ref : (TB, CS_PAD)         f32 scratch for max-pooled features
    """
    M = tile_batch * seq_tile
    cs_pad = conv_ref.shape[1]
    x = emb_ref[...]                                             # (M, E)

    # Tap 0: no shift needed, start the f32 accumulator directly.
    acc = jnp.dot(x, wall_ref[0], preferred_element_type=jnp.float32)

    # Zero the scratch tail once; shifted reads that run past the tile see 0,
    # which only ever lands on masked positions / zero-weight channels.
    conv_ref[pl.ds(M, 8), :] = jnp.zeros((8, cs_pad), jnp.float32)

    # Taps 1..kmax-1: out[t] += emb[t + j] @ W_all[j].  Shift by j rows by
    # round-tripping the tap result through VMEM scratch (plain ref slices).
    for j in range(1, num_taps):
        conv_ref[pl.ds(0, M), :] = jnp.dot(
            x, wall_ref[j], preferred_element_type=jnp.float32)
        acc = acc + conv_ref[pl.ds(j, M), :]

    # Mask invalid trailing positions per window, then AdaptiveMaxPool2d((1,1))
    # == max over all valid conv positions, done per batch row (aligned slabs).
    conv_ref[pl.ds(0, M), :] = acc + mask_ref[...]
    for b in range(tile_batch):
        seg = conv_ref[pl.ds(b * seq_tile, seq_tile), :]         # (L_pad, CS_PAD)
        pooled_ref[pl.ds(b, 1), :] = jnp.max(seg, axis=0, keepdims=True)

    # Classifier (concat is folded into the channel layout of wc; conv biases
    # are folded into bc in the wrapper).  Lane-dense (TB, 128) store.
    out_ref[...] = (jnp.dot(pooled_ref[...], wc_ref[...],
                            preferred_element_type=jnp.float32) + bc_ref[...])


def textcnn_forward(tokens, params, *, window_size, out_channels, num_classes,
                    batch_tile=8, compute_dtype=jnp.bfloat16):
    emb_table = params["embedding"]
    E = emb_table.shape[1]
    B, L = tokens.shape
    C = out_channels
    nwin = len(window_size)
    Cs = nwin * C
    kmax = max(window_size)

    TB = batch_tile                       # keep a multiple of 8 (sublane-dense)
    L_pad = _round_up(L, 8)               # aligned per-row slab inside the tile
    B_pad = _round_up(B, TB)
    M = TB * L_pad
    CS_PAD = _round_up(Cs, 128)           # lane-dense conv-channel dim
    NC_PAD = _round_up(num_classes, 128)  # lane-dense logits dim

    # --- glue: embedding lookup + flatten to a 2D, matmul-ready layout -------
    emb = jnp.take(emb_table, tokens, axis=0)                    # [B, L, E]
    emb = jnp.pad(emb, ((0, B_pad - B), (0, L_pad - L), (0, 0)))
    emb_flat = emb.reshape(B_pad * L_pad, E).astype(compute_dtype)

    # --- per-tap stacked conv weights: W_all[j, :, w*C + c] = W_k[c, 0, j, :] -
    w_all = jnp.zeros((kmax, E, CS_PAD), jnp.float32)
    for w, k in enumerate(window_size):
        wk = params[f"conv{k}_w"].reshape(C, k, E)               # torch (C,1,k,E)
        w_all = w_all.at[:k, :, w * C:(w + 1) * C].set(
            jnp.transpose(wk, (1, 2, 0)))                        # (k, E, C)
    w_all = w_all.astype(compute_dtype)

    # --- position validity mask (0 valid / -1e30 invalid), tiled per slab ----
    mask = jnp.zeros((L_pad, CS_PAD), jnp.float32)
    pos = jnp.arange(L_pad)
    for w, k in enumerate(window_size):
        col = jnp.where(pos < (L - k + 1), 0.0, _NEG).astype(jnp.float32)
        mask = mask.at[:, w * C:(w + 1) * C].set(col[:, None])
    mask_tiled = jnp.tile(mask, (TB, 1))                         # (M, CS_PAD)

    # --- classifier weight/bias, conv biases folded in, lane-padded ----------
    fc_wT = params["fc_w"].T                                     # (Cs, NC)
    conv_b = jnp.concatenate([params[f"conv{k}_b"] for k in window_size])
    bc = params["fc_b"] + conv_b @ fc_wT                         # (NC,)
    wc_pad = jnp.zeros((CS_PAD, NC_PAD), jnp.float32).at[:Cs, :num_classes].set(fc_wT)
    bc_pad = jnp.zeros((1, NC_PAD), jnp.float32).at[0, :num_classes].set(bc)

    grid = (B_pad // TB,)
    kernel = functools.partial(_textcnn_kernel, num_taps=kmax,
                               tile_batch=TB, seq_tile=L_pad)

    out = pl.pallas_call(
        kernel,
        out_shape=jax.ShapeDtypeStruct((B_pad, NC_PAD), jnp.float32),
        grid=grid,
        in_specs=[
            pl.BlockSpec((M, E), lambda b: (b, 0)),              # emb tile
            pl.BlockSpec((kmax, E, CS_PAD), lambda b: (0, 0, 0)),
            pl.BlockSpec((M, CS_PAD), lambda b: (0, 0)),
            pl.BlockSpec((CS_PAD, NC_PAD), lambda b: (0, 0)),
            pl.BlockSpec((1, NC_PAD), lambda b: (0, 0)),
        ],
        out_specs=pl.BlockSpec((TB, NC_PAD), lambda b: (b, 0)),
        scratch_shapes=[
            pltpu.VMEM((M + 8, CS_PAD), jnp.float32),            # conv scratch
            pltpu.VMEM((TB, CS_PAD), jnp.float32),               # pooled feats
        ],
        compiler_params=pltpu.CompilerParams(
            dimension_semantics=("parallel",),
            # Working set is tiny (<1 MiB per step); 32 MiB is safe on
            # v5e/v6e (128 MiB VMEM) and v7x (64 MiB VMEM).
            vmem_limit_bytes=32 * 1024 * 1024),
    )(emb_flat, w_all, mask_tiled, wc_pad, bc_pad)

    return out[:B, :num_classes]                                 # [B, NC]


def textcnn_reference(tokens, params, *, window_size):
    # Pure-JAX (f32) reference mirroring the PyTorch forward exactly.
    emb = jnp.take(params["embedding"], tokens, axis=0)          # [B, L, E]
    B, L, E = emb.shape
    feats = []
    for k in window_size:
        Wk = params[f"conv{k}_w"][:, 0]                          # [C, k, E]
        bk = params[f"conv{k}_b"]
        Lk = L - k + 1
        conv = jnp.stack(
            [jnp.einsum('bke,cke->bc', emb[:, t:t + k, :], Wk) + bk
             for t in range(Lk)], axis=-1)                       # [B, C, Lk]
        feats.append(conv.max(axis=-1))                          # [B, C]
    f = jnp.concatenate(feats, axis=1)                           # [B, 3*C]
    return f @ params["fc_w"].T + params["fc_b"]


if __name__ == "__main__":
    vocab_size = 100
    embedding_size = 128
    window_size = [3, 4, 5]
    out_channels = 2
    num_classes = 10
    B, L = 12, 20   # exercises batch padding (12 -> 16) and seq padding (20 -> 24)

    key = jax.random.PRNGKey(0)
    keys = jax.random.split(key, 10)

    params = {
        "embedding": jax.random.normal(
            keys[0], (vocab_size, embedding_size), jnp.float32),
    }
    for i, k in enumerate(window_size):
        s = 1.0 / np.sqrt(k * embedding_size)
        params[f"conv{k}_w"] = jax.random.uniform(
            keys[1 + i], (out_channels, 1, k, embedding_size), jnp.float32, -s, s)
        params[f"conv{k}_b"] = jax.random.uniform(
            keys[4 + i], (out_channels,), jnp.float32, -s, s)
    sfc = 1.0 / np.sqrt(len(window_size) * out_channels)
    params["fc_w"] = jax.random.uniform(
        keys[7], (num_classes, len(window_size) * out_channels), jnp.float32, -sfc, sfc)
    params["fc_b"] = jax.random.uniform(
        keys[8], (num_classes,), jnp.float32, -sfc, sfc)

    tokens = jax.random.randint(keys[9], (B, L), 0, vocab_size, dtype=jnp.int32)

    logits = textcnn_forward(
        tokens, params, window_size=window_size,
        out_channels=out_channels, num_classes=num_classes,
        batch_tile=8, compute_dtype=jnp.bfloat16)
    logits = jax.block_until_ready(logits)

    ref = textcnn_reference(tokens, params, window_size=window_size)
    # bf16 conv operands (f32 accumulation) vs. the f32 reference -> ~1e-3
    # absolute error on O(1) logits; 2e-2 tolerance is a comfortable margin.
    np.testing.assert_allclose(np.asarray(logits), np.asarray(ref),
                               rtol=2e-2, atol=2e-2)
    print("KERNEL_OK")
</pallas_src>

<mosaic_0001>
module attributes {stable_mosaic.version = 11 : i64} {
  func.func @_textcnn_kernel(%arg0: i32, %arg1: memref<192x128xbf16, #tpu.memory_space<vmem>>, %arg2: memref<5x128x128xbf16, #tpu.memory_space<vmem>>, %arg3: memref<192x128xf32, #tpu.memory_space<vmem>>, %arg4: memref<128x128xf32, #tpu.memory_space<vmem>>, %arg5: memref<1x128xf32, #tpu.memory_space<vmem>>, %arg6: memref<8x128xf32, #tpu.memory_space<vmem>>, %arg7: memref<200x128xf32, #tpu.memory_space<vmem>>, %arg8: memref<8x128xf32, #tpu.memory_space<vmem>>) attributes {dimension_semantics = [#tpu.dimension_semantics<parallel>], iteration_bounds = array<i64: 2>, scalar_prefetch = 0 : i64, scratch_operands = 2 : i64, tpu.core_type = #tpu.core_type<tc>, window_params = [{transform_indices = @transform_0, window_bounds = array<i64: 192, 128>}, {pipeline_mode = #tpu.pipeline_mode<synchronous>, transform_indices = @transform_1, window_bounds = array<i64: 5, 128, 128>}, {pipeline_mode = #tpu.pipeline_mode<synchronous>, transform_indices = @transform_2, window_bounds = array<i64: 192, 128>}, {pipeline_mode = #tpu.pipeline_mode<synchronous>, transform_indices = @transform_3, window_bounds = array<i64: 128, 128>}, {pipeline_mode = #tpu.pipeline_mode<synchronous>, transform_indices = @transform_4, window_bounds = array<i64: 1, 128>}, {transform_indices = @transform_5, window_bounds = array<i64: 8, 128>}]} {
    %c0 = arith.constant 0 : index
    %c0_0 = arith.constant 0 : index
    %0 = vector.load %arg1[%c0, %c0_0] : memref<192x128xbf16, #tpu.memory_space<vmem>>, vector<192x128xbf16>
    %c0_1 = arith.constant 0 : index
    %c0_2 = arith.constant 0 : index
    %c0_3 = arith.constant 0 : index
    %1 = vector.load %arg2[%c0_1, %c0_2, %c0_3] : memref<5x128x128xbf16, #tpu.memory_space<vmem>>, vector<1x128x128xbf16>
    %2 = vector.shape_cast %1 : vector<1x128x128xbf16> to vector<128x128xbf16>
    %cst = arith.constant dense<0.000000e+00> : vector<192x128xf32>
    %3 = tpu.matmul %0, %2, %cst {dimension_numbers = #tpu.dot_dimension_numbers<[1], [0], [0], [1], [0, 0, 1, 1], [], []>} : vector<192x128xbf16>, vector<128x128xbf16>, vector<192x128xf32> -> vector<192x128xf32>
    %cst_4 = arith.constant 0.000000e+00 : f32
    %4 = vector.broadcast %cst_4 : f32 to vector<8x128xf32>
    %c192 = arith.constant 192 : index
    %c0_5 = arith.constant 0 : index
    %5 = vector.load %arg7[%c192, %c0_5] : memref<200x128xf32, #tpu.memory_space<vmem>>, vector<8x128xf32>
    tpu.vector_store %arg7[%c192, %c0_5], %4 {strides = array<i32>} : memref<200x128xf32, #tpu.memory_space<vmem>>, vector<8x128xf32>,
    %c1 = arith.constant 1 : index
    %c0_6 = arith.constant 0 : index
    %c0_7 = arith.constant 0 : index
    %6 = vector.load %arg2[%c1, %c0_6, %c0_7] : memref<5x128x128xbf16, #tpu.memory_space<vmem>>, vector<1x128x128xbf16>
    %7 = vector.shape_cast %6 : vector<1x128x128xbf16> to vector<128x128xbf16>
    %cst_8 = arith.constant dense<0.000000e+00> : vector<192x128xf32>
    %8 = tpu.matmul %0, %7, %cst_8 {dimension_numbers = #tpu.dot_dimension_numbers<[1], [0], [0], [1], [0, 0, 1, 1], [], []>} : vector<192x128xbf16>, vector<128x128xbf16>, vector<192x128xf32> -> vector<192x128xf32>
    %c0_9 = arith.constant 0 : index
    %c0_10 = arith.constant 0 : index
    %9 = vector.load %arg7[%c0_9, %c0_10] : memref<200x128xf32, #tpu.memory_space<vmem>>, vector<192x128xf32>
    tpu.vector_store %arg7[%c0_9, %c0_10], %8 {strides = array<i32>} : memref<200x128xf32, #tpu.memory_space<vmem>>, vector<192x128xf32>,
    %c1_11 = arith.constant 1 : index
    %c0_12 = arith.constant 0 : index
    %10 = vector.load %arg7[%c1_11, %c0_12] : memref<200x128xf32, #tpu.memory_space<vmem>>, vector<192x128xf32>
    %11 = arith.addf %3, %10 : vector<192x128xf32>
    %c2 = arith.constant 2 : index
    %c0_13 = arith.constant 0 : index
    %c0_14 = arith.constant 0 : index
    %12 = vector.load %arg2[%c2, %c0_13, %c0_14] : memref<5x128x128xbf16, #tpu.memory_space<vmem>>, vector<1x128x128xbf16>
    %13 = vector.shape_cast %12 : vector<1x128x128xbf16> to vector<128x128xbf16>
    %cst_15 = arith.constant dense<0.000000e+00> : vector<192x128xf32>
    %14 = tpu.matmul %0, %13, %cst_15 {dimension_numbers = #tpu.dot_dimension_numbers<[1], [0], [0], [1], [0, 0, 1, 1], [], []>} : vector<192x128xbf16>, vector<128x128xbf16>, vector<192x128xf32> -> vector<192x128xf32>
    %c0_16 = arith.constant 0 : index
    %c0_17 = arith.constant 0 : index
    %15 = vector.load %arg7[%c0_16, %c0_17] : memref<200x128xf32, #tpu.memory_space<vmem>>, vector<192x128xf32>
    tpu.vector_store %arg7[%c0_16, %c0_17], %14 {strides = array<i32>} : memref<200x128xf32, #tpu.memory_space<vmem>>, vector<192x128xf32>,
    %c2_18 = arith.constant 2 : index
    %c0_19 = arith.constant 0 : index
    %16 = vector.load %arg7[%c2_18, %c0_19] : memref<200x128xf32, #tpu.memory_space<vmem>>, vector<192x128xf32>
    %17 = arith.addf %11, %16 : vector<192x128xf32>
    %c3 = arith.constant 3 : index
    %c0_20 = arith.constant 0 : index
    %c0_21 = arith.constant 0 : index
    %18 = vector.load %arg2[%c3, %c0_20, %c0_21] : memref<5x128x128xbf16, #tpu.memory_space<vmem>>, vector<1x128x128xbf16>
    %19 = vector.shape_cast %18 : vector<1x128x128xbf16> to vector<128x128xbf16>
    %cst_22 = arith.constant dense<0.000000e+00> : vector<192x128xf32>
    %20 = tpu.matmul %0, %19, %cst_22 {dimension_numbers = #tpu.dot_dimension_numbers<[1], [0], [0], [1], [0, 0, 1, 1], [], []>} : vector<192x128xbf16>, vector<128x128xbf16>, vector<192x128xf32> -> vector<192x128xf32>
    %c0_23 = arith.constant 0 : index
    %c0_24 = arith.constant 0 : index
    %21 = vector.load %arg7[%c0_23, %c0_24] : memref<200x128xf32, #tpu.memory_space<vmem>>, vector<192x128xf32>
    tpu.vector_store %arg7[%c0_23, %c0_24], %20 {strides = array<i32>} : memref<200x128xf32, #tpu.memory_space<vmem>>, vector<192x128xf32>,
    %c3_25 = arith.constant 3 : index
    %c0_26 = arith.constant 0 : index
    %22 = vector.load %arg7[%c3_25, %c0_26] : memref<200x128xf32, #tpu.memory_space<vmem>>, vector<192x128xf32>
    %23 = arith.addf %17, %22 : vector<192x128xf32>
    %c4 = arith.constant 4 : index
    %c0_27 = arith.constant 0 : index
    %c0_28 = arith.constant 0 : index
    %24 = vector.load %arg2[%c4, %c0_27, %c0_28] : memref<5x128x128xbf16, #tpu.memory_space<vmem>>, vector<1x128x128xbf16>
    %25 = vector.shape_cast %24 : vector<1x128x128xbf16> to vector<128x128xbf16>
    %cst_29 = arith.constant dense<0.000000e+00> : vector<192x128xf32>
    %26 = tpu.matmul %0, %25, %cst_29 {dimension_numbers = #tpu.dot_dimension_numbers<[1], [0], [0], [1], [0, 0, 1, 1], [], []>} : vector<192x128xbf16>, vector<128x128xbf16>, vector<192x128xf32> -> vector<192x128xf32>
    %c0_30 = arith.constant 0 : index
    %c0_31 = arith.constant 0 : index
    %27 = vector.load %arg7[%c0_30, %c0_31] : memref<200x128xf32, #tpu.memory_space<vmem>>, vector<192x128xf32>
    tpu.vector_store %arg7[%c0_30, %c0_31], %26 {strides = array<i32>} : memref<200x128xf32, #tpu.memory_space<vmem>>, vector<192x128xf32>,
    %c4_32 = arith.constant 4 : index
    %c0_33 = arith.constant 0 : index
    %28 = vector.load %arg7[%c4_32, %c0_33] : memref<200x128xf32, #tpu.memory_space<vmem>>, vector<192x128xf32>
    %29 = arith.addf %23, %28 : vector<192x128xf32>
    %c0_34 = arith.constant 0 : index
    %c0_35 = arith.constant 0 : index
    %30 = vector.load %arg3[%c0_34, %c0_35] : memref<192x128xf32, #tpu.memory_space<vmem>>, vector<192x128xf32>
    %31 = arith.addf %29, %30 : vector<192x128xf32>
    %c0_36 = arith.constant 0 : index
    %c0_37 = arith.constant 0 : index
    %32 = vector.load %arg7[%c0_36, %c0_37] : memref<200x128xf32, #tpu.memory_space<vmem>>, vector<192x128xf32>
    tpu.vector_store %arg7[%c0_36, %c0_37], %31 {strides = array<i32>} : memref<200x128xf32, #tpu.memory_space<vmem>>, vector<192x128xf32>,
    %c0_38 = arith.constant 0 : index
    %c0_39 = arith.constant 0 : index
    %33 = vector.load %arg7[%c0_38, %c0_39] : memref<200x128xf32, #tpu.memory_space<vmem>>, vector<24x128xf32>
    %cst_40 = arith.constant dense<0xFF800000> : vector<128xf32>
    %34 = vector.multi_reduction <maximumf>, %33, %cst_40 [0] : vector<24x128xf32> to vector<128xf32>
    %35 = vector.shape_cast %34 : vector<128xf32> to vector<1x128xf32>
    %c0_41 = arith.constant 0 : index
    %c0_42 = arith.constant 0 : index
    %36 = vector.load %arg8[%c0_41, %c0_42] : memref<8x128xf32, #tpu.memory_space<vmem>>, vector<1x128xf32>
    tpu.vector_store %arg8[%c0_41, %c0_42], %35 {strides = array<i32>} : memref<8x128xf32, #tpu.memory_space<vmem>>, vector<1x128xf32>,
    %c24 = arith.constant 24 : index
    %c0_43 = arith.constant 0 : index
    %37 = vector.load %arg7[%c24, %c0_43] : memref<200x128xf32, #tpu.memory_space<vmem>>, vector<24x128xf32>
    %cst_44 = arith.constant dense<0xFF800000> : vector<128xf32>
    %38 = vector.multi_reduction <maximumf>, %37, %cst_44 [0] : vector<24x128xf32> to vector<128xf32>
    %39 = vector.shape_cast %38 : vector<128xf32> to vector<1x128xf32>
    %c1_45 = arith.constant 1 : index
    %c0_46 = arith.constant 0 : index
    %40 = vector.load %arg8[%c1_45, %c0_46] : memref<8x128xf32, #tpu.memory_space<vmem>>, vector<1x128xf32>
    tpu.vector_store %arg8[%c1_45, %c0_46], %39 {strides = array<i32>} : memref<8x128xf32, #tpu.memory_space<vmem>>, vector<1x128xf32>,
    %c48 = arith.constant 48 : index
    %c0_47 = arith.constant 0 : index
    %41 = vector.load %arg7[%c48, %c0_47] : memref<200x128xf32, #tpu.memory_space<vmem>>, vector<24x128xf32>
    %cst_48 = arith.constant dense<0xFF800000> : vector<128xf32>
    %42 = vector.multi_reduction <maximumf>, %41, %cst_48 [0] : vector<24x128xf32> to vector<128xf32>
    %43 = vector.shape_cast %42 : vector<128xf32> to vector<1x128xf32>
    %c2_49 = arith.constant 2 : index
    %c0_50 = arith.constant 0 : index
    %44 = vector.load %arg8[%c2_49, %c0_50] : memref<8x128xf32, #tpu.memory_space<vmem>>, vector<1x128xf32>
    tpu.vector_store %arg8[%c2_49, %c0_50], %43 {strides = array<i32>} : memref<8x128xf32, #tpu.memory_space<vmem>>, vector<1x128xf32>,
    %c72 = arith.constant 72 : index
    %c0_51 = arith.constant 0 : index
    %45 = vector.load %arg7[%c72, %c0_51] : memref<200x128xf32, #tpu.memory_space<vmem>>, vector<24x128xf32>
    %cst_52 = arith.constant dense<0xFF800000> : vector<128xf32>
    %46 = vector.multi_reduction <maximumf>, %45, %cst_52 [0] : vector<24x128xf32> to vector<128xf32>
    %47 = vector.shape_cast %46 : vector<128xf32> to vector<1x128xf32>
    %c3_53 = arith.constant 3 : index
    %c0_54 = arith.constant 0 : index
    %48 = vector.load %arg8[%c3_53, %c0_54] : memref<8x128xf32, #tpu.memory_space<vmem>>, vector<1x128xf32>
    tpu.vector_store %arg8[%c3_53, %c0_54], %47 {strides = array<i32>} : memref<8x128xf32, #tpu.memory_space<vmem>>, vector<1x128xf32>,
    %c96 = arith.constant 96 : index
    %c0_55 = arith.constant 0 : index
    %49 = vector.load %arg7[%c96, %c0_55] : memref<200x128xf32, #tpu.memory_space<vmem>>, vector<24x128xf32>
    %cst_56 = arith.constant dense<0xFF800000> : vector<128xf32>
    %50 = vector.multi_reduction <maximumf>, %49, %cst_56 [0] : vector<24x128xf32> to vector<128xf32>
    %51 = vector.shape_cast %50 : vector<128xf32> to vector<1x128xf32>
    %c4_57 = arith.constant 4 : index
    %c0_58 = arith.constant 0 : index
    %52 = vector.load %arg8[%c4_57, %c0_58] : memref<8x128xf32, #tpu.memory_space<vmem>>, vector<1x128xf32>
    tpu.vector_store %arg8[%c4_57, %c0_58], %51 {strides = array<i32>} : memref<8x128xf32, #tpu.memory_space<vmem>>, vector<1x128xf32>,
    %c120 = arith.constant 120 : index
    %c0_59 = arith.constant 0 : index
    %53 = vector.load %arg7[%c120, %c0_59] : memref<200x128xf32, #tpu.memory_space<vmem>>, vector<24x128xf32>
    %cst_60 = arith.constant dense<0xFF800000> : vector<128xf32>
    %54 = vector.multi_reduction <maximumf>, %53, %cst_60 [0] : vector<24x128xf32> to vector<128xf32>
    %55 = vector.shape_cast %54 : vector<128xf32> to vector<1x128xf32>
    %c5 = arith.constant 5 : index
    %c0_61 = arith.constant 0 : index
    %56 = vector.load %arg8[%c5, %c0_61] : memref<8x128xf32, #tpu.memory_space<vmem>>, vector<1x128xf32>
    tpu.vector_store %arg8[%c5, %c0_61], %55 {strides = array<i32>} : memref<8x128xf32, #tpu.memory_space<vmem>>, vector<1x128xf32>,
    %c144 = arith.constant 144 : index
    %c0_62 = arith.constant 0 : index
    %57 = vector.load %arg7[%c144, %c0_62] : memref<200x128xf32, #tpu.memory_space<vmem>>, vector<24x128xf32>
    %cst_63 = arith.constant dense<0xFF800000> : vector<128xf32>
    %58 = vector.multi_reduction <maximumf>, %57, %cst_63 [0] : vector<24x128xf32> to vector<128xf32>
    %59 = vector.shape_cast %58 : vector<128xf32> to vector<1x128xf32>
    %c6 = arith.constant 6 : index
    %c0_64 = arith.constant 0 : index
    %60 = vector.load %arg8[%c6, %c0_64] : memref<8x128xf32, #tpu.memory_space<vmem>>, vector<1x128xf32>
    tpu.vector_store %arg8[%c6, %c0_64], %59 {strides = array<i32>} : memref<8x128xf32, #tpu.memory_space<vmem>>, vector<1x128xf32>,
    %c168 = arith.constant 168 : index
    %c0_65 = arith.constant 0 : index
    %61 = vector.load %arg7[%c168, %c0_65] : memref<200x128xf32, #tpu.memory_space<vmem>>, vector<24x128xf32>
    %cst_66 = arith.constant dense<0xFF800000> : vector<128xf32>
    %62 = vector.multi_reduction <maximumf>, %61, %cst_66 [0] : vector<24x128xf32> to vector<128xf32>
    %63 = vector.shape_cast %62 : vector<128xf32> to vector<1x128xf32>
    %c7 = arith.constant 7 : index
    %c0_67 = arith.constant 0 : index
    %64 = vector.load %arg8[%c7, %c0_67] : memref<8x128xf32, #tpu.memory_space<vmem>>, vector<1x128xf32>
    tpu.vector_store %arg8[%c7, %c0_67], %63 {strides = array<i32>} : memref<8x128xf32, #tpu.memory_space<vmem>>, vector<1x128xf32>,
    %c0_68 = arith.constant 0 : index
    %c0_69 = arith.constant 0 : index
    %65 = vector.load %arg8[%c0_68, %c0_69] : memref<8x128xf32, #tpu.memory_space<vmem>>, vector<8x128xf32>
    %c0_70 = arith.constant 0 : index
    %c0_71 = arith.constant 0 : index
    %66 = vector.load %arg4[%c0_70, %c0_71] : memref<128x128xf32, #tpu.memory_space<vmem>>, vector<128x128xf32>
    %cst_72 = arith.constant dense<0.000000e+00> : vector<8x128xf32>
    %67 = tpu.matmul %65, %66, %cst_72 {dimension_numbers = #tpu.dot_dimension_numbers<[1], [0], [0], [1], [0, 0, 1, 1], [], []>} : vector<8x128xf32>, vector<128x128xf32>, vector<8x128xf32> -> vector<8x128xf32>
    %c0_73 = arith.constant 0 : index
    %c0_74 = arith.constant 0 : index
    %68 = vector.load %arg5[%c0_73, %c0_74] : memref<1x128xf32, #tpu.memory_space<vmem>>, vector<1x128xf32>
    %69 = vector.broadcast %68 : vector<1x128xf32> to vector<8x128xf32>
    %70 = arith.addf %67, %69 : vector<8x128xf32>
    %c0_75 = arith.constant 0 : index
    %c0_76 = arith.constant 0 : index
    %71 = vector.load %arg6[%c0_75, %c0_76] : memref<8x128xf32, #tpu.memory_space<vmem>>, vector<8x128xf32>
    tpu.vector_store %arg6[%c0_75, %c0_76], %70 {strides = array<i32>} : memref<8x128xf32, #tpu.memory_space<vmem>>, vector<8x128xf32>,
    return
  }
  func.func @transform_0(%arg0: i32) -> (i32, i32) {
    %c0_i32 = arith.constant 0 : i32
    %c0_i32_0 = arith.constant 0 : i32
    return %arg0, %c0_i32 : i32, i32
  }
  func.func @transform_1(%arg0: i32) -> (i32, i32, i32) {
    %c0_i32 = arith.constant 0 : i32
    %c0_i32_0 = arith.constant 0 : i32
    %c0_i32_1 = arith.constant 0 : i32
    %c0_i32_2 = arith.constant 0 : i32
    return %c0_i32, %c0_i32_0, %c0_i32_1 : i32, i32, i32
  }
  func.func @transform_2(%arg0: i32) -> (i32, i32) {
    %c0_i32 = arith.constant 0 : i32
    %c0_i32_0 = arith.constant 0 : i32
    %c0_i32_1 = arith.constant 0 : i32
    return %c0_i32, %c0_i32_0 : i32, i32
  }
  func.func @transform_3(%arg0: i32) -> (i32, i32) {
    %c0_i32 = arith.constant 0 : i32
    %c0_i32_0 = arith.constant 0 : i32
    %c0_i32_1 = arith.constant 0 : i32
    return %c0_i32, %c0_i32_0 : i32, i32
  }
  func.func @transform_4(%arg0: i32) -> (i32, i32) {
    %c0_i32 = arith.constant 0 : i32
    %c0_i32_0 = arith.constant 0 : i32
    %c0_i32_1 = arith.constant 0 : i32
    return %c0_i32, %c0_i32_0 : i32, i32
  }
  func.func @transform_5(%arg0: i32) -> (i32, i32) {
    %c0_i32 = arith.constant 0 : i32
    %c0_i32_0 = arith.constant 0 : i32
    return %arg0, %c0_i32 : i32, i32
  }
}

</mosaic_0001>

<llo_original>
// kernel: tpu_custom_call.1
$region0: #{tpu_custom_call.1}
  #allocation0 [shape = 'u32[]', space=smem, size = 0x4, offset = 0x4, fixed_abs, tag = 'smem constant byte address 0x4 - core index']
  #allocation1 [shape = 'u32[72,128]{1,0:T(1,128)}', space=vmem, size = 0x9000, scoped, tag = 'internal scratch']
  #allocation2 [shape = 'f32[200,128]{1,0:T(8,128)}', space=vmem, size = 0x19000, scoped, tag = 'scratch operand']
  #allocation3 [shape = 'f32[8,128]{1,0:T(8,128)}', space=vmem, size = 0x1000, scoped, tag = 'scratch operand']
  %s0 = inlined_call_operand.hbm [shape: bf16[384,128], index: 0, kind: input, shape index: {}]
  %s1 = inlined_call_operand.hbm [shape: bf16[5,128,128], index: 1, kind: input, shape index: {}]
  %s2 = inlined_call_operand.hbm [shape: f32[192,128], index: 2, kind: input, shape index: {}]
  %s3 = inlined_call_operand.hbm [shape: f32[128,128], index: 3, kind: input, shape index: {}]
  %s4 = inlined_call_operand.vmem [shape: f32[1,128], index: 4, kind: input, shape index: {}]
  %s5 = inlined_call_operand.hbm [shape: f32[16,128], index: 5, kind: output, shape index: {}]
  %s6 = sld [smem:[#allocation0]]
  $region69: #{tpu_custom_call.1} parent=0
    _
  %s8 = ssub.s32 1, %s6
  %s9 = scalar_select 0, %s8, %s6
  $region1: #{tpu_custom_call.1} parent=0
    #allocation4 [shape = 'u8[98304]{0}', space=vmem, size = 0x18000, scoped, tag = 'input window, operand 0']
    #allocation5 [shape = 's32[2]{0}', space=sflag, size = 0x8, scoped, tag = 'scoped memory for tpu_custom_call.1']
    #allocation6 [shape = 's32[2]{0}', space=sflag, size = 0x8, scoped, tag = 'scoped memory for tpu_custom_call.1']
    #allocation7 [shape = 'u8[163840]{0}', space=vmem, size = 0x28000, scoped, tag = 'input window, operand 1, single buffered']
    #allocation8 [shape = 's32[1]{0}', space=sflag, size = 0x4, scoped, tag = 'scoped memory for tpu_custom_call.1']
    #allocation9 [shape = 'u8[98304]{0}', space=vmem, size = 0x18000, scoped, tag = 'input window, operand 2, single buffered']
    #allocation10 [shape = 'u8[65536]{0}', space=vmem, size = 0x10000, scoped, tag = 'input window, operand 3, single buffered']
    #allocation11 [shape = 's32[1]{0}', space=sflag, size = 0x4, scoped, tag = 'scoped memory for tpu_custom_call.1']
    #allocation12 [shape = 'u8[8192]{0}', space=vmem, size = 0x2000, scoped, tag = 'output window, operand 0']
    %10 = vsyncpa [#allocation5], 0
    %s11 = scalar_lea.sflag [#allocation5], 1
    %12 = vsyncpa %s11, 0
    %13 = vsyncpa [#allocation8], 0
    %14 = vsyncpa [#allocation11], 0
    %15 = vsyncpa [#allocation6], 0
    %s16 = scalar_lea.sflag [#allocation6], 1
    %17 = vsyncpa %s16, 0
    loop: start=0, step=1, limit=4
    $region2: #{tpu_custom_call.1} parent=1 // loop_pre_header
      _
    $region3: #{tpu_custom_call.1} parent=1 // loop_header
      %s19 = sphi 0, %s23
      %p20 = scmp.ge.s32.totalorder %s19, 4
      %s29 = sphi 0, %s31
      %s32 = sphi 0, %s29
      %s33 = sphi 0, %s32
      %s49 = sphi 0, %s33
      %s53 = sphi 0, %s53
      %s55 = sphi 0, %s53
      %s56 = sphi 0, %s55
      %s70 = sphi 0, %s56
      %s74 = sphi 0, %s74
      %s76 = sphi 0, %s74
      %s77 = sphi 0, %s76
      %s91 = sphi 0, %s77
      %s95 = sphi 0, %s95
      %s97 = sphi 0, %s95
      %s98 = sphi 0, %s97
      %s112 = sphi 0, %s98
      %s116 = sphi 0, %s116
      %s118 = sphi 0, %s116
      %s119 = sphi 0, %s118
      %s133 = sphi 0, %s119
      %s139 = sphi 0, %s141
      %s142 = sphi 0, %s139
      %s143 = sphi 0, %s142
      %s159 = sphi 0, %s143
    $region4: #{tpu_custom_call.1} parent=1 // loop_header_branch
      %22 = sbr.rel (%p20) target = $region8
    $region5: #{tpu_custom_call.1} parent=1 // loop_body
      %s24 = ssub.s32 %s19, 1
      %s25 = ssub.s32 %s19, 2
      %s26 = sadd.s32 %s19, 1
      %s27 = ssub.s32 %s19, %s26
      %p28 = scmp.eq.s32.totalorder %s27, 0
      %s30 = sadd.s32 %s29, 1
      %s31 = scalar_select %p28, %s29, %s30
      %p34 = pneg %p28
      %p35 = scmp.eq.s32.totalorder %s19, 1
      %p36 = por %p34, %p35
      %p37 = scmp.ne.s32.totalorder %s29, %s32
      %p38 = scmp.eq.s32.totalorder %s19, 0
      %p39 = por %p37, %p38
      %p40 = scmp.ne.s32.totalorder %s29, %s32
      %p41 = scmp.eq.s32.totalorder %s24, 1
      %p42 = por %p40, %p41
      %p43 = scmp.ne.s32.totalorder %s32, %s33
      %p44 = scmp.eq.s32.totalorder %s24, 0
      %p45 = por %p43, %p44
      %p46 = scmp.ne.s32.totalorder %s32, %s33
      %p47 = scmp.eq.s32.totalorder %s25, 1
      %p48 = por %p46, %p47
      %p50 = scmp.ne.s32.totalorder %s33, %s49
      %p51 = scmp.eq.s32.totalorder %s25, 0
      %p52 = por %p50, %p51
      %s54 = sadd.s32 %s53, 1
      %p57 = scmp.eq.s32.totalorder %s19, 1
      %p58 = scmp.ne.s32.totalorder %s53, %s55
      %p59 = scmp.eq.s32.totalorder %s19, 0
      %p60 = por %p58, %p59
      %p61 = scmp.ne.s32.totalorder %s53, %s55
      %p62 = scmp.eq.s32.totalorder %s24, 1
      %p63 = por %p61, %p62
      %p64 = scmp.ne.s32.totalorder %s55, %s56
      %p65 = scmp.eq.s32.totalorder %s24, 0
      %p66 = por %p64, %p65
      %p67 = scmp.ne.s32.totalorder %s55, %s56
      %p68 = scmp.eq.s32.totalorder %s25, 1
      %p69 = por %p67, %p68
      %p71 = scmp.ne.s32.totalorder %s56, %s70
      %p72 = scmp.eq.s32.totalorder %s25, 0
      %p73 = por %p71, %p72
      %s75 = sadd.s32 %s74, 1
      %p78 = scmp.eq.s32.totalorder %s19, 1
      %p79 = scmp.ne.s32.totalorder %s74, %s76
      %p80 = scmp.eq.s32.totalorder %s19, 0
      %p81 = por %p79, %p80
      %p82 = scmp.ne.s32.totalorder %s74, %s76
      %p83 = scmp.eq.s32.totalorder %s24, 1
      %p84 = por %p82, %p83
      %p85 = scmp.ne.s32.totalorder %s76, %s77
      %p86 = scmp.eq.s32.totalorder %s24, 0
      %p87 = por %p85, %p86
      %p88 = scmp.ne.s32.totalorder %s76, %s77
      %p89 = scmp.eq.s32.totalorder %s25, 1
      %p90 = por %p88, %p89
      %p92 = scmp.ne.s32.totalorder %s77, %s91
      %p93 = scmp.eq.s32.totalorder %s25, 0
      %p94 = por %p92, %p93
      %s96 = sadd.s32 %s95, 1
      %p99 = scmp.eq.s32.totalorder %s19, 1
      %p100 = scmp.ne.s32.totalorder %s95, %s97
      %p101 = scmp.eq.s32.totalorder %s19, 0
      %p102 = por %p100, %p101
      %p103 = scmp.ne.s32.totalorder %s95, %s97
      %p104 = scmp.eq.s32.totalorder %s24, 1
      %p105 = por %p103, %p104
      %p106 = scmp.ne.s32.totalorder %s97, %s98
      %p107 = scmp.eq.s32.totalorder %s24, 0
      %p108 = por %p106, %p107
      %p109 = scmp.ne.s32.totalorder %s97, %s98
      %p110 = scmp.eq.s32.totalorder %s25, 1
      %p111 = por %p109, %p110
      %p113 = scmp.ne.s32.totalorder %s98, %s112
      %p114 = scmp.eq.s32.totalorder %s25, 0
      %p115 = por %p113, %p114
      %s117 = sadd.s32 %s116, 1
      %p120 = scmp.eq.s32.totalorder %s19, 1
      %p121 = scmp.ne.s32.totalorder %s116, %s118
      %p122 = scmp.eq.s32.totalorder %s19, 0
      %p123 = por %p121, %p122
      %p124 = scmp.ne.s32.totalorder %s116, %s118
      %p125 = scmp.eq.s32.totalorder %s24, 1
      %p126 = por %p124, %p125
      %p127 = scmp.ne.s32.totalorder %s118, %s119
      %p128 = scmp.eq.s32.totalorder %s24, 0
      %p129 = por %p127, %p128
      %p130 = scmp.ne.s32.totalorder %s118, %s119
      %p131 = scmp.eq.s32.totalorder %s25, 1
      %p132 = por %p130, %p131
      %p134 = scmp.ne.s32.totalorder %s119, %s133
      %p135 = scmp.eq.s32.totalorder %s25, 0
      %p136 = por %p134, %p135
      %s137 = ssub.s32 %s19, %s26
      %p138 = scmp.eq.s32.totalorder %s137, 0
      %s140 = sadd.s32 %s139, 1
      %s141 = scalar_select %p138, %s139, %s140
      %p144 = pneg %p138
      %p145 = scmp.eq.s32.totalorder %s19, 1
      %p146 = por %p144, %p145
      %p147 = scmp.ne.s32.totalorder %s139, %s142
      %p148 = scmp.eq.s32.totalorder %s19, 0
      %p149 = por %p147, %p148
      %p150 = scmp.ne.s32.totalorder %s139, %s142
      %p151 = scmp.eq.s32.totalorder %s24, 1
      %p152 = por %p150, %p151
      %p153 = scmp.ne.s32.totalorder %s142, %s143
      %p154 = scmp.eq.s32.totalorder %s24, 0
      %p155 = por %p153, %p154
      %p156 = scmp.ne.s32.totalorder %s142, %s143
      %p157 = scmp.eq.s32.totalorder %s25, 1
      %p158 = por %p156, %p157
      %p160 = scmp.ne.s32.totalorder %s143, %s159
      %p161 = scmp.eq.s32.totalorder %s25, 0
      %p162 = por %p160, %p161
      %p163 = scmp.le.s32.totalorder 1, %s19
      %p164 = scmp.lt.s32.totalorder %s19, 3
      %p165 = pnand %p163, %p164
      %p166 = pneg %p165
      // Predicated region
      $region9: #{tpu_custom_call.1} parent=5 // pred_check
        _
      $region10: #{tpu_custom_call.1} parent=5 // pred_check_branch
        %168 = sbr.rel (%p165) target = $region12
      $region11: #{tpu_custom_call.1} parent=5 // pred_region
        %s169 = ssub.s32 %s19, 1
        // Predicated region
        $region13: #{tpu_custom_call.1} parent=11 // pred_check
          %p170 = pneg %p66
        $region14: #{tpu_custom_call.1} parent=11 // pred_check_branch
          %172 = sbr.rel (%p170) target = $region16
        $region15: #{tpu_custom_call.1} parent=11 // pred_region
          %174 = vsyncadd [#allocation8], 0
          %s175 = sshll.u32 %s1, 4
          %s176 = int_to_ptr.hbm [resolvable:$true] %s175
          %s177 = sshll.u32 [#allocation7], 4
          %s178 = int_to_ptr.vmem [resolvable:$true] %s177
          %183 = dma.hbm_to_vmem [thread:$0]  %s176, 5120, %s178, [#allocation8], 64, 64, 4
        $region16: #{tpu_custom_call.1} parent=11 // pred_fallthru
          _
        // Predicated region
        $region17: #{tpu_custom_call.1} parent=11 // pred_check
          %p184 = pneg %p87
        $region18: #{tpu_custom_call.1} parent=11 // pred_check_branch
          %186 = sbr.rel (%p184) target = $region20
        $region19: #{tpu_custom_call.1} parent=11 // pred_region
          %188 = vsyncadd [#allocation8], 0
          %s189 = sshll.u32 %s2, 4
          %s190 = int_to_ptr.hbm [resolvable:$true] %s189
          %s191 = sshll.u32 [#allocation9], 4
          %s192 = int_to_ptr.vmem [resolvable:$true] %s191
          %197 = dma.hbm_to_vmem [thread:$0]  %s190, 3072, %s192, [#allocation8], 128, 128, 8
        $region20: #{tpu_custom_call.1} parent=11 // pred_fallthru
          _
        // Predicated region
        $region21: #{tpu_custom_call.1} parent=11 // pred_check
          %p198 = pneg %p108
        $region22: #{tpu_custom_call.1} parent=11 // pred_check_branch
          %200 = sbr.rel (%p198) target = $region24
        $region23: #{tpu_custom_call.1} parent=11 // pred_region
          %202 = vsyncadd [#allocation11], 0
          %s203 = sshll.u32 %s3, 4
          %s204 = int_to_ptr.hbm [resolvable:$true] %s203
          %s205 = sshll.u32 [#allocation10], 4
          %s206 = int_to_ptr.vmem [resolvable:$true] %s205
          %211 = dma.hbm_to_vmem [thread:$0]  %s204, 2048, %s206, [#allocation11], 128, 128, 8
        $region24: #{tpu_custom_call.1} parent=11 // pred_fallthru
          _
        // Predicated region
        $region25: #{tpu_custom_call.1} parent=11 // pred_check
          %p212 = pneg %p129
        $region26: #{tpu_custom_call.1} parent=11 // pred_check_branch
          %214 = sbr.rel (%p212) target = $region28
        $region27: #{tpu_custom_call.1} parent=11 // pred_region
          _
        $region28: #{tpu_custom_call.1} parent=11 // pred_fallthru
          _
      $region12: #{tpu_custom_call.1} parent=5 // pred_fallthru
        _
      %p215 = scmp.lt.s32.totalorder %s19, 2
      // Predicated region
      $region29: #{tpu_custom_call.1} parent=5 // pred_check
        %p216 = pneg %p215
      $region30: #{tpu_custom_call.1} parent=5 // pred_check_branch
        %218 = sbr.rel (%p216) target = $region32
      $region31: #{tpu_custom_call.1} parent=5 // pred_region
        // Predicated region
        $region33: #{tpu_custom_call.1} parent=31 // pred_check
          %p219 = pneg %p39
        $region34: #{tpu_custom_call.1} parent=31 // pred_check_branch
          %221 = sbr.rel (%p219) target = $region36
        $region35: #{tpu_custom_call.1} parent=31 // pred_region
          %s222 = sand.u32 %s29, 1
          %s223 = scalar_lea.sflag [#allocation5], %s222
          %s224 = sand.u32 %s29, 1
          %s225 = smul.addr %s224, 96
          %s226 = scalar_lea.vmem [#allocation4], %s225
          %s227 = smul.u32 24, %s19
          %229 = vsyncadd %s223, 0
          %s230 = smul.addr %s227, 4
          %s231 = scalar_lea.hbm %s0, %s230
          %s232 = sshll.u32 %s231, 4
          %s233 = int_to_ptr.hbm [resolvable:$true] %s232
          %s234 = sshll.u32 %s226, 4
          %s235 = int_to_ptr.vmem [resolvable:$true] %s234
          %240 = dma.hbm_to_vmem [thread:$0]  %s233, 1536, %s235, %s223, 64, 64, 4
        $region36: #{tpu_custom_call.1} parent=31 // pred_fallthru
          _
      $region32: #{tpu_custom_call.1} parent=5 // pred_fallthru
        _
      %p241 = scmp.le.s32.totalorder 1, %s19
      %p242 = scmp.lt.s32.totalorder %s19, 3
      %p243 = pnand %p241, %p242
      %p244 = pneg %p243
      // Predicated region
      $region37: #{tpu_custom_call.1} parent=5 // pred_check
        _
      $region38: #{tpu_custom_call.1} parent=5 // pred_check_branch
        %246 = sbr.rel (%p243) target = $region40
      $region39: #{tpu_custom_call.1} parent=5 // pred_region
        %s247 = ssub.s32 %s19, 1
        %s248 = sand.u32 %s32, 1
        %s249 = scalar_lea.sflag [#allocation5], %s248
        %s250 = sand.u32 %s32, 1
        %s251 = smul.addr %s250, 96
        %s252 = scalar_lea.vmem [#allocation4], %s251
        // Predicated region
        $region41: #{tpu_custom_call.1} parent=39 // pred_check
          %p253 = pneg %p45
        $region42: #{tpu_custom_call.1} parent=39 // pred_check_branch
          %255 = sbr.rel (%p253) target = $region44
        $region43: #{tpu_custom_call.1} parent=39 // pred_region
          %257 = dma.done %s249, 1536
        $region44: #{tpu_custom_call.1} parent=39 // pred_fallthru
          _
        // Predicated region
        $region45: #{tpu_custom_call.1} parent=39 // pred_check
          %p258 = pneg %p66
        $region46: #{tpu_custom_call.1} parent=39 // pred_check_branch
          %260 = sbr.rel (%p258) target = $region48
        $region47: #{tpu_custom_call.1} parent=39 // pred_region
          %262 = dma.done [#allocation8], 5120
        $region48: #{tpu_custom_call.1} parent=39 // pred_fallthru
          _
        // Predicated region
        $region49: #{tpu_custom_call.1} parent=39 // pred_check
          %p263 = pneg %p87
        $region50: #{tpu_custom_call.1} parent=39 // pred_check_branch
          %265 = sbr.rel (%p263) target = $region52
        $region51: #{tpu_custom_call.1} parent=39 // pred_region
          %267 = dma.done [#allocation8], 3072
        $region52: #{tpu_custom_call.1} parent=39 // pred_fallthru
          _
        // Predicated region
        $region53: #{tpu_custom_call.1} parent=39 // pred_check
          %p268 = pneg %p108
        $region54: #{tpu_custom_call.1} parent=39 // pred_check_branch
          %270 = sbr.rel (%p268) target = $region56
        $region55: #{tpu_custom_call.1} parent=39 // pred_region
          %272 = dma.done [#allocation11], 2048
        $region56: #{tpu_custom_call.1} parent=39 // pred_fallthru
          _
        %s273 = sand.u32 %s32, 1
        %s274 = scalar_lea.sflag [#allocation5], %s273
        %s275 = sand.u32 %s32, 1
        %s276 = smul.addr %s275, 96
        %s277 = scalar_lea.vmem [#allocation4], %s276
        %p278 = pneg %p45
        %p279 = pneg %p42
        %p280 = pneg %p66
        %p281 = pneg %p63
        %p282 = pneg %p87
        %p283 = pneg %p84
        %p284 = pneg %p108
        %p285 = pneg %p105
        %p286 = pneg %p129
        %p287 = pneg %p126
        %p288 = pneg %p155
        %p289 = pneg %p152
        %s290 = sand.u32 %s142, 1
        %s291 = scalar_lea.sflag [#allocation6], %s290
        %s292 = sand.u32 %s142, 1
        %s293 = smul.addr %s292, 8
        %s294 = scalar_lea.vmem [#allocation12], %s293
        %s295 = smul.u32 24, %s24
        %v296 = vld [vmem:[%s252] sm:$0xf]
        %v297 = vld [vmem:[%s252 + $0x4] sm:$0xf]
        %v298 = vld [vmem:[%s252 + $0x8] sm:$0xf]
        %v299 = vld [vmem:[%s252 + $0xc] sm:$0xf]
        %v300 = vld [vmem:[%s252 + $0x10] sm:$0xf]
        %v301 = vld [vmem:[%s252 + $0x14] sm:$0xf]
        %v302 = vld [vmem:[%s252 + $0x18] sm:$0xf]
        %v303 = vld [vmem:[%s252 + $0x1c] sm:$0xf]
        %v304 = vld [vmem:[%s252 + $0x20] sm:$0xf]
        %v305 = vld [vmem:[%s252 + $0x24] sm:$0xf]
        %v306 = vld [vmem:[%s252 + $0x28] sm:$0xf]
        %v307 = vld [vmem:[%s252 + $0x2c] sm:$0xf]
        %v308 = vld [vmem:[%s252 + $0x30] sm:$0xf]
        %v309 = vld [vmem:[%s252 + $0x34] sm:$0xf]
        %v310 = vld [vmem:[%s252 + $0x38] sm:$0xf]
        %v311 = vld [vmem:[%s252 + $0x3c] sm:$0xf]
        %v312 = vld [vmem:[%s252 + $0x40] sm:$0xf]
        %v313 = vld [vmem:[%s252 + $0x44] sm:$0xf]
        %v314 = vld [vmem:[%s252 + $0x48] sm:$0xf]
        %v315 = vld [vmem:[%s252 + $0x4c] sm:$0xf]
        %v316 = vld [vmem:[%s252 + $0x50] sm:$0xf]
        %v317 = vld [vmem:[%s252 + $0x54] sm:$0xf]
        %v318 = vld [vmem:[%s252 + $0x58] sm:$0xf]
        %v319 = vld [vmem:[%s252 + $0x5c] sm:$0xf]
        %v320 = vld [vmem:[#allocation7] sm:$0xf]
        %v321 = vld [vmem:[#allocation7 + $0x4] sm:$0xf]
        %v322 = vld [vmem:[#allocation7 + $0x8] sm:$0xf]
        %v323 = vld [vmem:[#allocation7 + $0xc] sm:$0xf]
        %v324 = vld [vmem:[#allocation7 + $0x10] sm:$0xf]
        %v325 = vld [vmem:[#allocation7 + $0x14] sm:$0xf]
        %v326 = vld [vmem:[#allocation7 + $0x18] sm:$0xf]
        %v327 = vld [vmem:[#allocation7 + $0x1c] sm:$0xf]
        %v328 = vld [vmem:[#allocation7 + $0x20] sm:$0xf]
        %v329 = vld [vmem:[#allocation7 + $0x24] sm:$0xf]
        %v330 = vld [vmem:[#allocation7 + $0x28] sm:$0xf]
        %v331 = vld [vmem:[#allocation7 + $0x2c] sm:$0xf]
        %v332 = vld [vmem:[#allocation7 + $0x30] sm:$0xf]
        %v333 = vld [vmem:[#allocation7 + $0x34] sm:$0xf]
        %v334 = vld [vmem:[#allocation7 + $0x38] sm:$0xf]
        %v335 = vld [vmem:[#allocation7 + $0x3c] sm:$0xf]
        %336 = vst [vmem:[#allocation2 + $0xc0] sm:$0xff] 0.0
        %s337 = scalar_lea.vmem [#allocation7], 64
        %v338 = vld [vmem:[%s337] sm:$0xf]
        %v339 = vld [vmem:[%s337 + $0x4] sm:$0xf]
        %v340 = vld [vmem:[%s337 + $0x8] sm:$0xf]
        %v341 = vld [vmem:[%s337 + $0xc] sm:$0xf]
        %v342 = vld [vmem:[%s337 + $0x10] sm:$0xf]
        %v343 = vld [vmem:[%s337 + $0x14] sm:$0xf]
        %v344 = vld [vmem:[%s337 + $0x18] sm:$0xf]
        %v345 = vld [vmem:[%s337 + $0x1c] sm:$0xf]
        %v346 = vld [vmem:[%s337 + $0x20] sm:$0xf]
        %v347 = vld [vmem:[%s337 + $0x24] sm:$0xf]
        %v348 = vld [vmem:[%s337 + $0x28] sm:$0xf]
        %v349 = vld [vmem:[%s337 + $0x2c] sm:$0xf]
        %v350 = vld [vmem:[%s337 + $0x30] sm:$0xf]
        %v351 = vld [vmem:[%s337 + $0x34] sm:$0xf]
        %v352 = vld [vmem:[%s337 + $0x38] sm:$0xf]
        %v353 = vld [vmem:[%s337 + $0x3c] sm:$0xf]
        %v378 = vunpack.c.l.b16 %v296
        %v379 = vunpack.c.l.b16 %v297
        %v380 = vunpack.c.l.b16 %v298
        %v381 = vunpack.c.l.b16 %v299
        %v382 = vunpack.c.l.b16 %v300
        %v383 = vunpack.c.l.b16 %v301
        %v384 = vunpack.c.l.b16 %v302
        %v385 = vunpack.c.l.b16 %v303
        %v386 = vunpack.c.l.b16 %v304
        %v387 = vunpack.c.l.b16 %v305
        %v388 = vunpack.c.l.b16 %v306
        %v389 = vunpack.c.l.b16 %v307
        %v390 = vunpack.c.l.b16 %v308
        %v391 = vunpack.c.l.b16 %v309
        %v392 = vunpack.c.l.b16 %v310
        %v393 = vunpack.c.l.b16 %v311
        %v394 = vunpack.c.l.b16 %v312
        %v395 = vunpack.c.l.b16 %v313
        %v396 = vunpack.c.l.b16 %v314
        %v397 = vunpack.c.l.b16 %v315
        %v398 = vunpack.c.l.b16 %v316
        %v399 = vunpack.c.l.b16 %v317
        %v400 = vunpack.c.l.b16 %v318
        %v401 = vunpack.c.l.b16 %v319
        %v402 = vpack.c.b16 %v379, %v378
        %v403 = vpack.c.b16 %v381, %v380
        %v404 = vpack.c.b16 %v383, %v382
        %v405 = vpack.c.b16 %v385, %v384
        %v406 = vpack.c.b16 %v387, %v386
        %v407 = vpack.c.b16 %v389, %v388
        %v408 = vpack.c.b16 %v391, %v390
        %v409 = vpack.c.b16 %v393, %v392
        %v410 = vpack.c.b16 %v395, %v394
        %v411 = vpack.c.b16 %v397, %v396
        %v412 = vpack.c.b16 %v399, %v398
        %v413 = vpack.c.b16 %v401, %v400
        %v442 = vunpack.c.l.b16 %v338
        %v443 = vunpack.c.l.b16 %v339
        %v444 = vunpack.c.l.b16 %v340
        %v445 = vunpack.c.l.b16 %v341
        %v446 = vunpack.c.l.b16 %v342
        %v447 = vunpack.c.l.b16 %v343
        %v448 = vunpack.c.l.b16 %v344
        %v449 = vunpack.c.l.b16 %v345
        %v450 = vunpack.c.l.b16 %v346
        %v451 = vunpack.c.l.b16 %v347
        %v452 = vunpack.c.l.b16 %v348
        %v453 = vunpack.c.l.b16 %v349
        %v454 = vunpack.c.l.b16 %v350
        %v455 = vunpack.c.l.b16 %v351
        %v456 = vunpack.c.l.b16 %v352
        %v457 = vunpack.c.l.b16 %v353
        %v458 = vpack.c.b16 %v443, %v442
        %v459 = vpack.c.b16 %v445, %v444
        %v460 = vpack.c.b16 %v447, %v446
        %v461 = vpack.c.b16 %v449, %v448
        %v462 = vpack.c.b16 %v451, %v450
        %v463 = vpack.c.b16 %v453, %v452
        %v464 = vpack.c.b16 %v455, %v454
        %v465 = vpack.c.b16 %v457, %v456
        %474 = vmatpush.bf16.msra.mxu0 %v465
        %475 = vmatpush.bf16.msra.mxu0 %v464
        %476 = vmatpush.bf16.msra.mxu0 %v463
        %477 = vmatpush.bf16.msra.mxu0 %v462
        %478 = vmatpush.bf16.msra.mxu0 %v461
        %479 = vmatpush.bf16.msra.mxu0 %v460
        %480 = vmatpush.bf16.msra.mxu0 %v459
        %481 = vmatpush.bf16.msra.mxu0 %v458
        %482 = vmatmul.bf16.gmra.mxu0 %v402
        %v483 = vpop.f32.mrf.mxu0
        %v484 = vadd.f32 0.0, %v483
        %v485 = vpop.f32.mrf.mxu0
        %v486 = vadd.f32 0.0, %v485
        %487 = vmatmul.bf16.gmra.mxu0 %v403
        %v488 = vpop.f32.mrf.mxu0
        %v489 = vadd.f32 0.0, %v488
        %v490 = vpop.f32.mrf.mxu0
        %v491 = vadd.f32 0.0, %v490
        %492 = vmatmul.bf16.gmra.mxu0 %v404
        %v493 = vpop.f32.mrf.mxu0
        %v494 = vadd.f32 0.0, %v493
        %v495 = vpop.f32.mrf.mxu0
        %v496 = vadd.f32 0.0, %v495
        %497 = vmatmul.bf16.gmra.mxu0 %v405
        %v498 = vpop.f32.mrf.mxu0
        %v499 = vadd.f32 0.0, %v498
        %v500 = vpop.f32.mrf.mxu0
        %v501 = vadd.f32 0.0, %v500
        %502 = vmatmul.bf16.gmra.mxu0 %v406
        %v503 = vpop.f32.mrf.mxu0
        %v504 = vadd.f32 0.0, %v503
        %v505 = vpop.f32.mrf.mxu0
        %v506 = vadd.f32 0.0, %v505
        %507 = vmatmul.bf16.gmra.mxu0 %v407
        %v508 = vpop.f32.mrf.mxu0
        %v509 = vadd.f32 0.0, %v508
        %v510 = vpop.f32.mrf.mxu0
        %v511 = vadd.f32 0.0, %v510
        %512 = vmatmul.bf16.gmra.mxu0 %v408
        %v513 = vpop.f32.mrf.mxu0
        %v514 = vadd.f32 0.0, %v513
        %v515 = vpop.f32.mrf.mxu0
        %v516 = vadd.f32 0.0, %v515
        %517 = vmatmul.bf16.gmra.mxu0 %v409
        %v518 = vpop.f32.mrf.mxu0
        %v519 = vadd.f32 0.0, %v518
        %v520 = vpop.f32.mrf.mxu0
        %v521 = vadd.f32 0.0, %v520
        %522 = vmatmul.bf16.gmra.mxu0 %v410
        %v523 = vpop.f32.mrf.mxu0
        %v524 = vadd.f32 0.0, %v523
        %v525 = vpop.f32.mrf.mxu0
        %v526 = vadd.f32 0.0, %v525
        %527 = vmatmul.bf16.gmra.mxu0 %v411
        %v528 = vpop.f32.mrf.mxu0
        %v529 = vadd.f32 0.0, %v528
        %v530 = vpop.f32.mrf.mxu0
        %v531 = vadd.f32 0.0, %v530
        %532 = vmatmul.bf16.gmra.mxu0 %v412
        %v533 = vpop.f32.mrf.mxu0
        %v534 = vadd.f32 0.0, %v533
        %v535 = vpop.f32.mrf.mxu0
        %v536 = vadd.f32 0.0, %v535
        %537 = vmatmul.bf16.gmra.mxu0 %v413
        %v538 = vpop.f32.mrf.mxu0
        %v539 = vadd.f32 0.0, %v538
        %v540 = vpop.f32.mrf.mxu0
        %v541 = vadd.f32 0.0, %v540
        %542 = vdwg.mxu0
        %543 = vst [vmem:[#allocation2] sm:$0xff] %v484
        %544 = vst [vmem:[#allocation2 + $0x8] sm:$0xff] %v486
        %545 = vst [vmem:[#allocation2 + $0x10] sm:$0xff] %v489
        %546 = vst [vmem:[#allocation2 + $0x18] sm:$0xff] %v491
        %547 = vst [vmem:[#allocation2 + $0x20] sm:$0xff] %v494
        %548 = vst [vmem:[#allocation2 + $0x28] sm:$0xff] %v496
        %549 = vst [vmem:[#allocation2 + $0x30] sm:$0xff] %v499
        %550 = vst [vmem:[#allocation2 + $0x38] sm:$0xff] %v501
        %551 = vst [vmem:[#allocation2 + $0x40] sm:$0xff] %v504
        %552 = vst [vmem:[#allocation2 + $0x48] sm:$0xff] %v506
        %553 = vst [vmem:[#allocation2 + $0x50] sm:$0xff] %v509
        %554 = vst [vmem:[#allocation2 + $0x58] sm:$0xff] %v511
        %555 = vst [vmem:[#allocation2 + $0x60] sm:$0xff] %v514
        %556 = vst [vmem:[#allocation2 + $0x68] sm:$0xff] %v516
        %557 = vst [vmem:[#allocation2 + $0x70] sm:$0xff] %v519
        %558 = vst [vmem:[#allocation2 + $0x78] sm:$0xff] %v521
        %559 = vst [vmem:[#allocation2 + $0x80] sm:$0xff] %v524
        %560 = vst [vmem:[#allocation2 + $0x88] sm:$0xff] %v526
        %561 = vst [vmem:[#allocation2 + $0x90] sm:$0xff] %v529
        %562 = vst [vmem:[#allocation2 + $0x98] sm:$0xff] %v531
        %563 = vst [vmem:[#allocation2 + $0xa0] sm:$0xff] %v534
        %564 = vst [vmem:[#allocation2 + $0xa8] sm:$0xff] %v536
        %565 = vst [vmem:[#allocation2 + $0xb0] sm:$0xff] %v539
        %566 = vst [vmem:[#allocation2 + $0xb8] sm:$0xff] %v541
        %v567 = vld [vmem:[#allocation2 + $0x1] sm:$0xff]
        %v568 = vld [vmem:[#allocation2 + $0x9] sm:$0xff]
        %v569 = vld [vmem:[#allocation2 + $0x11] sm:$0xff]
        %v570 = vld [vmem:[#allocation2 + $0x19] sm:$0xff]
        %v571 = vld [vmem:[#allocation2 + $0x21] sm:$0xff]
        %v572 = vld [vmem:[#allocation2 + $0x29] sm:$0xff]
        %v573 = vld [vmem:[#allocation2 + $0x31] sm:$0xff]
        %v574 = vld [vmem:[#allocation2 + $0x39] sm:$0xff]
        %v575 = vld [vmem:[#allocation2 + $0x41] sm:$0xff]
        %v576 = vld [vmem:[#allocation2 + $0x49] sm:$0xff]
        %v577 = vld [vmem:[#allocation2 + $0x51] sm:$0xff]
        %v578 = vld [vmem:[#allocation2 + $0x59] sm:$0xff]
        %v579 = vld [vmem:[#allocation2 + $0x61] sm:$0xff]
        %v580 = vld [vmem:[#allocation2 + $0x69] sm:$0xff]
        %v581 = vld [vmem:[#allocation2 + $0x71] sm:$0xff]
        %v582 = vld [vmem:[#allocation2 + $0x79] sm:$0xff]
        %v583 = vld [vmem:[#allocation2 + $0x81] sm:$0xff]
        %v584 = vld [vmem:[#allocation2 + $0x89] sm:$0xff]
        %v585 = vld [vmem:[#allocation2 + $0x91] sm:$0xff]
        %v586 = vld [vmem:[#allocation2 + $0x99] sm:$0xff]
        %v587 = vld [vmem:[#allocation2 + $0xa1] sm:$0xff]
        %v588 = vld [vmem:[#allocation2 + $0xa9] sm:$0xff]
        %v589 = vld [vmem:[#allocation2 + $0xb1] sm:$0xff]
        %v590 = vld [vmem:[#allocation2 + $0xb9] sm:$0xff]
        %v607 = vunpack.c.l.b16 %v320
        %v608 = vunpack.c.l.b16 %v321
        %v609 = vunpack.c.l.b16 %v322
        %v610 = vunpack.c.l.b16 %v323
        %v611 = vunpack.c.l.b16 %v324
        %v612 = vunpack.c.l.b16 %v325
        %v613 = vunpack.c.l.b16 %v326
        %v614 = vunpack.c.l.b16 %v327
        %v615 = vunpack.c.l.b16 %v328
        %v616 = vunpack.c.l.b16 %v329
        %v617 = vunpack.c.l.b16 %v330
        %v618 = vunpack.c.l.b16 %v331
        %v619 = vunpack.c.l.b16 %v332
        %v620 = vunpack.c.l.b16 %v333
        %v621 = vunpack.c.l.b16 %v334
        %v622 = vunpack.c.l.b16 %v335
        %v623 = vpack.c.b16 %v608, %v607
        %v624 = vpack.c.b16 %v610, %v609
        %v625 = vpack.c.b16 %v612, %v611
        %v626 = vpack.c.b16 %v614, %v613
        %v627 = vpack.c.b16 %v616, %v615
        %v628 = vpack.c.b16 %v618, %v617
        %v629 = vpack.c.b16 %v620, %v619
        %v630 = vpack.c.b16 %v622, %v621
        %639 = vmatpush.bf16.msra.mxu0 %v630
        %640 = vmatpush.bf16.msra.mxu0 %v629
        %641 = vmatpush.bf16.msra.mxu0 %v628
        %642 = vmatpush.bf16.msra.mxu0 %v627
        %643 = vmatpush.bf16.msra.mxu0 %v626
        %644 = vmatpush.bf16.msra.mxu0 %v625
        %645 = vmatpush.bf16.msra.mxu0 %v624
        %646 = vmatpush.bf16.msra.mxu0 %v623
        %647 = vmatmul.bf16.gmra.mxu0 %v402
        %v648 = vpop.f32.mrf.mxu0
        %v649 = vadd.f32 %v567, %v648
        %v650 = vpop.f32.mrf.mxu0
        %v651 = vadd.f32 %v568, %v650
        %652 = vmatmul.bf16.gmra.mxu0 %v403
        %v653 = vpop.f32.mrf.mxu0
        %v654 = vadd.f32 %v569, %v653
        %v655 = vpop.f32.mrf.mxu0
        %v656 = vadd.f32 %v570, %v655
        %657 = vmatmul.bf16.gmra.mxu0 %v404
        %v658 = vpop.f32.mrf.mxu0
        %v659 = vadd.f32 %v571, %v658
        %v660 = vpop.f32.mrf.mxu0
        %v661 = vadd.f32 %v572, %v660
        %662 = vmatmul.bf16.gmra.mxu0 %v405
        %v663 = vpop.f32.mrf.mxu0
        %v664 = vadd.f32 %v573, %v663
        %v665 = vpop.f32.mrf.mxu0
        %v666 = vadd.f32 %v574, %v665
        %667 = vmatmul.bf16.gmra.mxu0 %v406
        %v668 = vpop.f32.mrf.mxu0
        %v669 = vadd.f32 %v575, %v668
        %v670 = vpop.f32.mrf.mxu0
        %v671 = vadd.f32 %v576, %v670
        %672 = vmatmul.bf16.gmra.mxu0 %v407
        %v673 = vpop.f32.mrf.mxu0
        %v674 = vadd.f32 %v577, %v673
        %v675 = vpop.f32.mrf.mxu0
        %v676 = vadd.f32 %v578, %v675
        %677 = vmatmul.bf16.gmra.mxu0 %v408
        %v678 = vpop.f32.mrf.mxu0
        %v679 = vadd.f32 %v579, %v678
        %v680 = vpop.f32.mrf.mxu0
        %v681 = vadd.f32 %v580, %v680
        %682 = vmatmul.bf16.gmra.mxu0 %v409
        %v683 = vpop.f32.mrf.mxu0
        %v684 = vadd.f32 %v581, %v683
        %v685 = vpop.f32.mrf.mxu0
        %v686 = vadd.f32 %v582, %v685
        %687 = vmatmul.bf16.gmra.mxu0 %v410
        %v688 = vpop.f32.mrf.mxu0
        %v689 = vadd.f32 %v583, %v688
        %v690 = vpop.f32.mrf.mxu0
        %v691 = vadd.f32 %v584, %v690
        %692 = vmatmul.bf16.gmra.mxu0 %v411
        %v693 = vpop.f32.mrf.mxu0
        %v694 = vadd.f32 %v585, %v693
        %v695 = vpop.f32.mrf.mxu0
        %v696 = vadd.f32 %v586, %v695
        %697 = vmatmul.bf16.gmra.mxu0 %v412
        %v698 = vpop.f32.mrf.mxu0
        %v699 = vadd.f32 %v587, %v698
        %v700 = vpop.f32.mrf.mxu0
        %v701 = vadd.f32 %v588, %v700
        %702 = vmatmul.bf16.gmra.mxu0 %v413
        %v703 = vpop.f32.mrf.mxu0
        %v704 = vadd.f32 %v589, %v703
        %v705 = vpop.f32.mrf.mxu0
        %v706 = vadd.f32 %v590, %v705
        %707 = vdwg.mxu0
        %s708 = scalar_lea.vmem [#allocation7], 128
        %v709 = vld [vmem:[%s708] sm:$0xf]
        %v710 = vld [vmem:[%s708 + $0x4] sm:$0xf]
        %v711 = vld [vmem:[%s708 + $0x8] sm:$0xf]
        %v712 = vld [vmem:[%s708 + $0xc] sm:$0xf]
        %v713 = vld [vmem:[%s708 + $0x10] sm:$0xf]
        %v714 = vld [vmem:[%s708 + $0x14] sm:$0xf]
        %v715 = vld [vmem:[%s708 + $0x18] sm:$0xf]
        %v716 = vld [vmem:[%s708 + $0x1c] sm:$0xf]
        %v717 = vld [vmem:[%s708 + $0x20] sm:$0xf]
        %v718 = vld [vmem:[%s708 + $0x24] sm:$0xf]
        %v719 = vld [vmem:[%s708 + $0x28] sm:$0xf]
        %v720 = vld [vmem:[%s708 + $0x2c] sm:$0xf]
        %v721 = vld [vmem:[%s708 + $0x30] sm:$0xf]
        %v722 = vld [vmem:[%s708 + $0x34] sm:$0xf]
        %v723 = vld [vmem:[%s708 + $0x38] sm:$0xf]
        %v724 = vld [vmem:[%s708 + $0x3c] sm:$0xf]
        %v741 = vunpack.c.l.b16 %v709
        %v742 = vunpack.c.l.b16 %v710
        %v743 = vunpack.c.l.b16 %v711
        %v744 = vunpack.c.l.b16 %v712
        %v745 = vunpack.c.l.b16 %v713
        %v746 = vunpack.c.l.b16 %v714
        %v747 = vunpack.c.l.b16 %v715
        %v748 = vunpack.c.l.b16 %v716
        %v749 = vunpack.c.l.b16 %v717
        %v750 = vunpack.c.l.b16 %v718
        %v751 = vunpack.c.l.b16 %v719
        %v752 = vunpack.c.l.b16 %v720
        %v753 = vunpack.c.l.b16 %v721
        %v754 = vunpack.c.l.b16 %v722
        %v755 = vunpack.c.l.b16 %v723
        %v756 = vunpack.c.l.b16 %v724
        %v757 = vpack.c.b16 %v742, %v741
        %v758 = vpack.c.b16 %v744, %v743
        %v759 = vpack.c.b16 %v746, %v745
        %v760 = vpack.c.b16 %v748, %v747
        %v761 = vpack.c.b16 %v750, %v749
        %v762 = vpack.c.b16 %v752, %v751
        %v763 = vpack.c.b16 %v754, %v753
        %v764 = vpack.c.b16 %v756, %v755
        %773 = vmatpush.bf16.msra.mxu0 %v764
        %774 = vmatpush.bf16.msra.mxu0 %v763
        %775 = vmatpush.bf16.msra.mxu0 %v762
        %776 = vmatpush.bf16.msra.mxu0 %v761
        %777 = vmatpush.bf16.msra.mxu0 %v760
        %778 = vmatpush.bf16.msra.mxu0 %v759
        %779 = vmatpush.bf16.msra.mxu0 %v758
        %780 = vmatpush.bf16.msra.mxu0 %v757
        %781 = vmatmul.bf16.gmra.mxu0 %v402
        %v782 = vpop.f32.mrf.mxu0
        %v783 = vadd.f32 0.0, %v782
        %v784 = vpop.f32.mrf.mxu0
        %v785 = vadd.f32 0.0, %v784
        %786 = vmatmul.bf16.gmra.mxu0 %v403
        %v787 = vpop.f32.mrf.mxu0
        %v788 = vadd.f32 0.0, %v787
        %v789 = vpop.f32.mrf.mxu0
        %v790 = vadd.f32 0.0, %v789
        %791 = vmatmul.bf16.gmra.mxu0 %v404
        %v792 = vpop.f32.mrf.mxu0
        %v793 = vadd.f32 0.0, %v792
        %v794 = vpop.f32.mrf.mxu0
        %v795 = vadd.f32 0.0, %v794
        %796 = vmatmul.bf16.gmra.mxu0 %v405
        %v797 = vpop.f32.mrf.mxu0
        %v798 = vadd.f32 0.0, %v797
        %v799 = vpop.f32.mrf.mxu0
        %v800 = vadd.f32 0.0, %v799
        %801 = vmatmul.bf16.gmra.mxu0 %v406
        %v802 = vpop.f32.mrf.mxu0
        %v803 = vadd.f32 0.0, %v802
        %v804 = vpop.f32.mrf.mxu0
        %v805 = vadd.f32 0.0, %v804
        %806 = vmatmul.bf16.gmra.mxu0 %v407
        %v807 = vpop.f32.mrf.mxu0
        %v808 = vadd.f32 0.0, %v807
        %v809 = vpop.f32.mrf.mxu0
        %v810 = vadd.f32 0.0, %v809
        %811 = vmatmul.bf16.gmra.mxu0 %v408
        %v812 = vpop.f32.mrf.mxu0
        %v813 = vadd.f32 0.0, %v812
        %v814 = vpop.f32.mrf.mxu0
        %v815 = vadd.f32 0.0, %v814
        %816 = vmatmul.bf16.gmra.mxu0 %v409
        %v817 = vpop.f32.mrf.mxu0
        %v818 = vadd.f32 0.0, %v817
        %v819 = vpop.f32.mrf.mxu0
        %v820 = vadd.f32 0.0, %v819
        %821 = vmatmul.bf16.gmra.mxu0 %v410
        %v822 = vpop.f32.mrf.mxu0
        %v823 = vadd.f32 0.0, %v822
        %v824 = vpop.f32.mrf.mxu0
        %v825 = vadd.f32 0.0, %v824
        %826 = vmatmul.bf16.gmra.mxu0 %v411
        %v827 = vpop.f32.mrf.mxu0
        %v828 = vadd.f32 0.0, %v827
        %v829 = vpop.f32.mrf.mxu0
        %v830 = vadd.f32 0.0, %v829
        %831 = vmatmul.bf16.gmra.mxu0 %v412
        %v832 = vpop.f32.mrf.mxu0
        %v833 = vadd.f32 0.0, %v832
        %v834 = vpop.f32.mrf.mxu0
        %v835 = vadd.f32 0.0, %v834
        %836 = vmatmul.bf16.gmra.mxu0 %v413
        %v837 = vpop.f32.mrf.mxu0
        %v838 = vadd.f32 0.0, %v837
        %v839 = vpop.f32.mrf.mxu0
        %v840 = vadd.f32 0.0, %v839
        %841 = vdwg.mxu0
        %842 = vst [vmem:[#allocation2] sm:$0xff] %v783
        %843 = vst [vmem:[#allocation2 + $0x8] sm:$0xff] %v785
        %844 = vst [vmem:[#allocation2 + $0x10] sm:$0xff] %v788
        %845 = vst [vmem:[#allocation2 + $0x18] sm:$0xff] %v790
        %846 = vst [vmem:[#allocation2 + $0x20] sm:$0xff] %v793
        %847 = vst [vmem:[#allocation2 + $0x28] sm:$0xff] %v795
        %848 = vst [vmem:[#allocation2 + $0x30] sm:$0xff] %v798
        %849 = vst [vmem:[#allocation2 + $0x38] sm:$0xff] %v800
        %850 = vst [vmem:[#allocation2 + $0x40] sm:$0xff] %v803
        %851 = vst [vmem:[#allocation2 + $0x48] sm:$0xff] %v805
        %852 = vst [vmem:[#allocation2 + $0x50] sm:$0xff] %v808
        %853 = vst [vmem:[#allocation2 + $0x58] sm:$0xff] %v810
        %854 = vst [vmem:[#allocation2 + $0x60] sm:$0xff] %v813
        %855 = vst [vmem:[#allocation2 + $0x68] sm:$0xff] %v815
        %856 = vst [vmem:[#allocation2 + $0x70] sm:$0xff] %v818
        %857 = vst [vmem:[#allocation2 + $0x78] sm:$0xff] %v820
        %858 = vst [vmem:[#allocation2 + $0x80] sm:$0xff] %v823
        %859 = vst [vmem:[#allocation2 + $0x88] sm:$0xff] %v825
        %860 = vst [vmem:[#allocation2 + $0x90] sm:$0xff] %v828
        %861 = vst [vmem:[#allocation2 + $0x98] sm:$0xff] %v830
        %862 = vst [vmem:[#allocation2 + $0xa0] sm:$0xff] %v833
        %863 = vst [vmem:[#allocation2 + $0xa8] sm:$0xff] %v835
        %864 = vst [vmem:[#allocation2 + $0xb0] sm:$0xff] %v838
        %865 = vst [vmem:[#allocation2 + $0xb8] sm:$0xff] %v840
        %v866 = vld [vmem:[#allocation2 + $0x2] sm:$0xff]
        %v867 = vld [vmem:[#allocation2 + $0xa] sm:$0xff]
        %v868 = vld [vmem:[#allocation2 + $0x12] sm:$0xff]
        %v869 = vld [vmem:[#allocation2 + $0x1a] sm:$0xff]
        %v870 = vld [vmem:[#allocation2 + $0x22] sm:$0xff]
        %v871 = vld [vmem:[#allocation2 + $0x2a] sm:$0xff]
        %v872 = vld [vmem:[#allocation2 + $0x32] sm:$0xff]
        %v873 = vld [vmem:[#allocation2 + $0x3a] sm:$0xff]
        %v874 = vld [vmem:[#allocation2 + $0x42] sm:$0xff]
        %v875 = vld [vmem:[#allocation2 + $0x4a] sm:$0xff]
        %v876 = vld [vmem:[#allocation2 + $0x52] sm:$0xff]
        %v877 = vld [vmem:[#allocation2 + $0x5a] sm:$0xff]
        %v878 = vld [vmem:[#allocation2 + $0x62] sm:$0xff]
        %v879 = vld [vmem:[#allocation2 + $0x6a] sm:$0xff]
        %v880 = vld [vmem:[#allocation2 + $0x72] sm:$0xff]
        %v881 = vld [vmem:[#allocation2 + $0x7a] sm:$0xff]
        %v882 = vld [vmem:[#allocation2 + $0x82] sm:$0xff]
        %v883 = vld [vmem:[#allocation2 + $0x8a] sm:$0xff]
        %v884 = vld [vmem:[#allocation2 + $0x92] sm:$0xff]
        %v885 = vld [vmem:[#allocation2 + $0x9a] sm:$0xff]
        %v886 = vld [vmem:[#allocation2 + $0xa2] sm:$0xff]
        %v887 = vld [vmem:[#allocation2 + $0xaa] sm:$0xff]
        %v888 = vld [vmem:[#allocation2 + $0xb2] sm:$0xff]
        %v889 = vld [vmem:[#allocation2 + $0xba] sm:$0xff]
        %v890 = vadd.f32 %v649, %v866
        %v891 = vadd.f32 %v651, %v867
        %v892 = vadd.f32 %v654, %v868
        %v893 = vadd.f32 %v656, %v869
        %v894 = vadd.f32 %v659, %v870
        %v895 = vadd.f32 %v661, %v871
        %v896 = vadd.f32 %v664, %v872
        %v897 = vadd.f32 %v666, %v873
        %v898 = vadd.f32 %v669, %v874
        %v899 = vadd.f32 %v671, %v875
        %v900 = vadd.f32 %v674, %v876
        %v901 = vadd.f32 %v676, %v877
        %v902 = vadd.f32 %v679, %v878
        %v903 = vadd.f32 %v681, %v879
        %v904 = vadd.f32 %v684, %v880
        %v905 = vadd.f32 %v686, %v881
        %v906 = vadd.f32 %v689, %v882
        %v907 = vadd.f32 %v691, %v883
        %v908 = vadd.f32 %v694, %v884
        %v909 = vadd.f32 %v696, %v885
        %v910 = vadd.f32 %v699, %v886
        %v911 = vadd.f32 %v701, %v887
        %v912 = vadd.f32 %v704, %v888
        %v913 = vadd.f32 %v706, %v889
        %s914 = scalar_lea.vmem [#allocation7], 192
        %v915 = vld [vmem:[%s914] sm:$0xf]
        %v916 = vld [vmem:[%s914 + $0x4] sm:$0xf]
        %v917 = vld [vmem:[%s914 + $0x8] sm:$0xf]
        %v918 = vld [vmem:[%s914 + $0xc] sm:$0xf]
        %v919 = vld [vmem:[%s914 + $0x10] sm:$0xf]
        %v920 = vld [vmem:[%s914 + $0x14] sm:$0xf]
        %v921 = vld [vmem:[%s914 + $0x18] sm:$0xf]
        %v922 = vld [vmem:[%s914 + $0x1c] sm:$0xf]
        %v923 = vld [vmem:[%s914 + $0x20] sm:$0xf]
        %v924 = vld [vmem:[%s914 + $0x24] sm:$0xf]
        %v925 = vld [vmem:[%s914 + $0x28] sm:$0xf]
        %v926 = vld [vmem:[%s914 + $0x2c] sm:$0xf]
        %v927 = vld [vmem:[%s914 + $0x30] sm:$0xf]
        %v928 = vld [vmem:[%s914 + $0x34] sm:$0xf]
        %v929 = vld [vmem:[%s914 + $0x38] sm:$0xf]
        %v930 = vld [vmem:[%s914 + $0x3c] sm:$0xf]
        %v947 = vunpack.c.l.b16 %v915
        %v948 = vunpack.c.l.b16 %v916
        %v949 = vunpack.c.l.b16 %v917
        %v950 = vunpack.c.l.b16 %v918
        %v951 = vunpack.c.l.b16 %v919
        %v952 = vunpack.c.l.b16 %v920
        %v953 = vunpack.c.l.b16 %v921
        %v954 = vunpack.c.l.b16 %v922
        %v955 = vunpack.c.l.b16 %v923
        %v956 = vunpack.c.l.b16 %v924
        %v957 = vunpack.c.l.b16 %v925
        %v958 = vunpack.c.l.b16 %v926
        %v959 = vunpack.c.l.b16 %v927
        %v960 = vunpack.c.l.b16 %v928
        %v961 = vunpack.c.l.b16 %v929
        %v962 = vunpack.c.l.b16 %v930
        %v963 = vpack.c.b16 %v948, %v947
        %v964 = vpack.c.b16 %v950, %v949
        %v965 = vpack.c.b16 %v952, %v951
        %v966 = vpack.c.b16 %v954, %v953
        %v967 = vpack.c.b16 %v956, %v955
        %v968 = vpack.c.b16 %v958, %v957
        %v969 = vpack.c.b16 %v960, %v959
        %v970 = vpack.c.b16 %v962, %v961
        %979 = vmatpush.bf16.msra.mxu0 %v970
        %980 = vmatpush.bf16.msra.mxu0 %v969
        %981 = vmatpush.bf16.msra.mxu0 %v968
        %982 = vmatpush.bf16.msra.mxu0 %v967
        %983 = vmatpush.bf16.msra.mxu0 %v966
        %984 = vmatpush.bf16.msra.mxu0 %v965
        %985 = vmatpush.bf16.msra.mxu0 %v964
        %986 = vmatpush.bf16.msra.mxu0 %v963
        %987 = vmatmul.bf16.gmra.mxu0 %v402
        %v988 = vpop.f32.mrf.mxu0
        %v989 = vadd.f32 0.0, %v988
        %v990 = vpop.f32.mrf.mxu0
        %v991 = vadd.f32 0.0, %v990
        %992 = vmatmul.bf16.gmra.mxu0 %v403
        %v993 = vpop.f32.mrf.mxu0
        %v994 = vadd.f32 0.0, %v993
        %v995 = vpop.f32.mrf.mxu0
        %v996 = vadd.f32 0.0, %v995
        %997 = vmatmul.bf16.gmra.mxu0 %v404
        %v998 = vpop.f32.mrf.mxu0
        %v999 = vadd.f32 0.0, %v998
        %v1000 = vpop.f32.mrf.mxu0
        %v1001 = vadd.f32 0.0, %v1000
        %1002 = vmatmul.bf16.gmra.mxu0 %v405
        %v1003 = vpop.f32.mrf.mxu0
        %v1004 = vadd.f32 0.0, %v1003
        %v1005 = vpop.f32.mrf.mxu0
        %v1006 = vadd.f32 0.0, %v1005
        %1007 = vmatmul.bf16.gmra.mxu0 %v406
        %v1008 = vpop.f32.mrf.mxu0
        %v1009 = vadd.f32 0.0, %v1008
        %v1010 = vpop.f32.mrf.mxu0
        %v1011 = vadd.f32 0.0, %v1010
        %1012 = vmatmul.bf16.gmra.mxu0 %v407
        %v1013 = vpop.f32.mrf.mxu0
        %v1014 = vadd.f32 0.0, %v1013
        %v1015 = vpop.f32.mrf.mxu0
        %v1016 = vadd.f32 0.0, %v1015
        %1017 = vmatmul.bf16.gmra.mxu0 %v408
        %v1018 = vpop.f32.mrf.mxu0
        %v1019 = vadd.f32 0.0, %v1018
        %v1020 = vpop.f32.mrf.mxu0
        %v1021 = vadd.f32 0.0, %v1020
        %1022 = vmatmul.bf16.gmra.mxu0 %v409
        %v1023 = vpop.f32.mrf.mxu0
        %v1024 = vadd.f32 0.0, %v1023
        %v1025 = vpop.f32.mrf.mxu0
        %v1026 = vadd.f32 0.0, %v1025
        %1027 = vmatmul.bf16.gmra.mxu0 %v410
        %v1028 = vpop.f32.mrf.mxu0
        %v1029 = vadd.f32 0.0, %v1028
        %v1030 = vpop.f32.mrf.mxu0
        %v1031 = vadd.f32 0.0, %v1030
        %1032 = vmatmul.bf16.gmra.mxu0 %v411
        %v1033 = vpop.f32.mrf.mxu0
        %v1034 = vadd.f32 0.0, %v1033
        %v1035 = vpop.f32.mrf.mxu0
        %v1036 = vadd.f32 0.0, %v1035
        %1037 = vmatmul.bf16.gmra.mxu0 %v412
        %v1038 = vpop.f32.mrf.mxu0
        %v1039 = vadd.f32 0.0, %v1038
        %v1040 = vpop.f32.mrf.mxu0
        %v1041 = vadd.f32 0.0, %v1040
        %1042 = vmatmul.bf16.gmra.mxu0 %v413
        %v1043 = vpop.f32.mrf.mxu0
        %v1044 = vadd.f32 0.0, %v1043
        %v1045 = vpop.f32.mrf.mxu0
        %v1046 = vadd.f32 0.0, %v1045
        %1047 = vdwg.mxu0
        %1048 = vst [vmem:[#allocation2] sm:$0xff] %v989
        %1049 = vst [vmem:[#allocation2 + $0x8] sm:$0xff] %v991
        %1050 = vst [vmem:[#allocation2 + $0x10] sm:$0xff] %v994
        %1051 = vst [vmem:[#allocation2 + $0x18] sm:$0xff] %v996
        %1052 = vst [vmem:[#allocation2 + $0x20] sm:$0xff] %v999
        %1053 = vst [vmem:[#allocation2 + $0x28] sm:$0xff] %v1001
        %1054 = vst [vmem:[#allocation2 + $0x30] sm:$0xff] %v1004
        %1055 = vst [vmem:[#allocation2 + $0x38] sm:$0xff] %v1006
        %1056 = vst [vmem:[#allocation2 + $0x40] sm:$0xff] %v1009
        %1057 = vst [vmem:[#allocation2 + $0x48] sm:$0xff] %v1011
        %1058 = vst [vmem:[#allocation2 + $0x50] sm:$0xff] %v1014
        %1059 = vst [vmem:[#allocation2 + $0x58] sm:$0xff] %v1016
        %1060 = vst [vmem:[#allocation2 + $0x60] sm:$0xff] %v1019
        %1061 = vst [vmem:[#allocation2 + $0x68] sm:$0xff] %v1021
        %1062 = vst [vmem:[#allocation2 + $0x70] sm:$0xff] %v1024
        %1063 = vst [vmem:[#allocation2 + $0x78] sm:$0xff] %v1026
        %1064 = vst [vmem:[#allocation2 + $0x80] sm:$0xff] %v1029
        %1065 = vst [vmem:[#allocation2 + $0x88] sm:$0xff] %v1031
        %1066 = vst [vmem:[#allocation2 + $0x90] sm:$0xff] %v1034
        %1067 = vst [vmem:[#allocation2 + $0x98] sm:$0xff] %v1036
        %1068 = vst [vmem:[#allocation2 + $0xa0] sm:$0xff] %v1039
        %1069 = vst [vmem:[#allocation2 + $0xa8] sm:$0xff] %v1041
        %1070 = vst [vmem:[#allocation2 + $0xb0] sm:$0xff] %v1044
        %1071 = vst [vmem:[#allocation2 + $0xb8] sm:$0xff] %v1046
        %v1072 = vld [vmem:[#allocation2 + $0x3] sm:$0xff]
        %v1073 = vld [vmem:[#allocation2 + $0xb] sm:$0xff]
        %v1074 = vld [vmem:[#allocation2 + $0x13] sm:$0xff]
        %v1075 = vld [vmem:[#allocation2 + $0x1b] sm:$0xff]
        %v1076 = vld [vmem:[#allocation2 + $0x23] sm:$0xff]
        %v1077 = vld [vmem:[#allocation2 + $0x2b] sm:$0xff]
        %v1078 = vld [vmem:[#allocation2 + $0x33] sm:$0xff]
        %v1079 = vld [vmem:[#allocation2 + $0x3b] sm:$0xff]
        %v1080 = vld [vmem:[#allocation2 + $0x43] sm:$0xff]
        %v1081 = vld [vmem:[#allocation2 + $0x4b] sm:$0xff]
        %v1082 = vld [vmem:[#allocation2 + $0x53] sm:$0xff]
        %v1083 = vld [vmem:[#allocation2 + $0x5b] sm:$0xff]
        %v1084 = vld [vmem:[#allocation2 + $0x63] sm:$0xff]
        %v1085 = vld [vmem:[#allocation2 + $0x6b] sm:$0xff]
        %v1086 = vld [vmem:[#allocation2 + $0x73] sm:$0xff]
        %v1087 = vld [vmem:[#allocation2 + $0x7b] sm:$0xff]
        %v1088 = vld [vmem:[#allocation2 + $0x83] sm:$0xff]
        %v1089 = vld [vmem:[#allocation2 + $0x8b] sm:$0xff]
        %v1090 = vld [vmem:[#allocation2 + $0x93] sm:$0xff]
        %v1091 = vld [vmem:[#allocation2 + $0x9b] sm:$0xff]
        %v1092 = vld [vmem:[#allocation2 + $0xa3] sm:$0xff]
        %v1093 = vld [vmem:[#allocation2 + $0xab] sm:$0xff]
        %v1094 = vld [vmem:[#allocation2 + $0xb3] sm:$0xff]
        %v1095 = vld [vmem:[#allocation2 + $0xbb] sm:$0xff]
        %v1096 = vadd.f32 %v890, %v1072
        %v1097 = vadd.f32 %v891, %v1073
        %v1098 = vadd.f32 %v892, %v1074
        %v1099 = vadd.f32 %v893, %v1075
        %v1100 = vadd.f32 %v894, %v1076
        %v1101 = vadd.f32 %v895, %v1077
        %v1102 = vadd.f32 %v896, %v1078
        %v1103 = vadd.f32 %v897, %v1079
        %v1104 = vadd.f32 %v898, %v1080
        %v1105 = vadd.f32 %v899, %v1081
        %v1106 = vadd.f32 %v900, %v1082
        %v1107 = vadd.f32 %v901, %v1083
        %v1108 = vadd.f32 %v902, %v1084
        %v1109 = vadd.f32 %v903, %v1085
        %v1110 = vadd.f32 %v904, %v1086
        %v1111 = vadd.f32 %v905, %v1087
        %v1112 = vadd.f32 %v906, %v1088
        %v1113 = vadd.f32 %v907, %v1089
        %v1114 = vadd.f32 %v908, %v1090
        %v1115 = vadd.f32 %v909, %v1091
        %v1116 = vadd.f32 %v910, %v1092
        %v1117 = vadd.f32 %v911, %v1093
        %v1118 = vadd.f32 %v912, %v1094
        %v1119 = vadd.f32 %v913, %v1095
        %s1120 = scalar_lea.vmem [#allocation7], 256
        %v1121 = vld [vmem:[%s1120] sm:$0xf]
        %v1122 = vld [vmem:[%s1120 + $0x4] sm:$0xf]
        %v1123 = vld [vmem:[%s1120 + $0x8] sm:$0xf]
        %v1124 = vld [vmem:[%s1120 + $0xc] sm:$0xf]
        %v1125 = vld [vmem:[%s1120 + $0x10] sm:$0xf]
        %v1126 = vld [vmem:[%s1120 + $0x14] sm:$0xf]
        %v1127 = vld [vmem:[%s1120 + $0x18] sm:$0xf]
        %v1128 = vld [vmem:[%s1120 + $0x1c] sm:$0xf]
        %v1129 = vld [vmem:[%s1120 + $0x20] sm:$0xf]
        %v1130 = vld [vmem:[%s1120 + $0x24] sm:$0xf]
        %v1131 = vld [vmem:[%s1120 + $0x28] sm:$0xf]
        %v1132 = vld [vmem:[%s1120 + $0x2c] sm:$0xf]
        %v1133 = vld [vmem:[%s1120 + $0x30] sm:$0xf]
        %v1134 = vld [vmem:[%s1120 + $0x34] sm:$0xf]
        %v1135 = vld [vmem:[%s1120 + $0x38] sm:$0xf]
        %v1136 = vld [vmem:[%s1120 + $0x3c] sm:$0xf]
        %v1153 = vunpack.c.l.b16 %v1121
        %v1154 = vunpack.c.l.b16 %v1122
        %v1155 = vunpack.c.l.b16 %v1123
        %v1156 = vunpack.c.l.b16 %v1124
        %v1157 = vunpack.c.l.b16 %v1125
        %v1158 = vunpack.c.l.b16 %v1126
        %v1159 = vunpack.c.l.b16 %v1127
        %v1160 = vunpack.c.l.b16 %v1128
        %v1161 = vunpack.c.l.b16 %v1129
        %v1162 = vunpack.c.l.b16 %v1130
        %v1163 = vunpack.c.l.b16 %v1131
        %v1164 = vunpack.c.l.b16 %v1132
        %v1165 = vunpack.c.l.b16 %v1133
        %v1166 = vunpack.c.l.b16 %v1134
        %v1167 = vunpack.c.l.b16 %v1135
        %v1168 = vunpack.c.l.b16 %v1136
        %v1169 = vpack.c.b16 %v1154, %v1153
        %v1170 = vpack.c.b16 %v1156, %v1155
        %v1171 = vpack.c.b16 %v1158, %v1157
        %v1172 = vpack.c.b16 %v1160, %v1159
        %v1173 = vpack.c.b16 %v1162, %v1161
        %v1174 = vpack.c.b16 %v1164, %v1163
        %v1175 = vpack.c.b16 %v1166, %v1165
        %v1176 = vpack.c.b16 %v1168, %v1167
        %1185 = vmatpush.bf16.msra.mxu0 %v1176
        %1186 = vmatpush.bf16.msra.mxu0 %v1175
        %1187 = vmatpush.bf16.msra.mxu0 %v1174
        %1188 = vmatpush.bf16.msra.mxu0 %v1173
        %1189 = vmatpush.bf16.msra.mxu0 %v1172
        %1190 = vmatpush.bf16.msra.mxu0 %v1171
        %1191 = vmatpush.bf16.msra.mxu0 %v1170
        %1192 = vmatpush.bf16.msra.mxu0 %v1169
        %1193 = vmatmul.bf16.gmra.mxu0 %v402
        %v1194 = vpop.f32.mrf.mxu0
        %v1195 = vadd.f32 0.0, %v1194
        %v1196 = vpop.f32.mrf.mxu0
        %v1197 = vadd.f32 0.0, %v1196
        %1198 = vmatmul.bf16.gmra.mxu0 %v403
        %v1199 = vpop.f32.mrf.mxu0
        %v1200 = vadd.f32 0.0, %v1199
        %v1201 = vpop.f32.mrf.mxu0
        %v1202 = vadd.f32 0.0, %v1201
        %1203 = vmatmul.bf16.gmra.mxu0 %v404
        %v1204 = vpop.f32.mrf.mxu0
        %v1205 = vadd.f32 0.0, %v1204
        %v1206 = vpop.f32.mrf.mxu0
        %v1207 = vadd.f32 0.0, %v1206
        %1208 = vmatmul.bf16.gmra.mxu0 %v405
        %v1209 = vpop.f32.mrf.mxu0
        %v1210 = vadd.f32 0.0, %v1209
        %v1211 = vpop.f32.mrf.mxu0
        %v1212 = vadd.f32 0.0, %v1211
        %1213 = vmatmul.bf16.gmra.mxu0 %v406
        %v1214 = vpop.f32.mrf.mxu0
        %v1215 = vadd.f32 0.0, %v1214
        %v1216 = vpop.f32.mrf.mxu0
        %v1217 = vadd.f32 0.0, %v1216
        %1218 = vmatmul.bf16.gmra.mxu0 %v407
        %v1219 = vpop.f32.mrf.mxu0
        %v1220 = vadd.f32 0.0, %v1219
        %v1221 = vpop.f32.mrf.mxu0
        %v1222 = vadd.f32 0.0, %v1221
        %1223 = vmatmul.bf16.gmra.mxu0 %v408
        %v1224 = vpop.f32.mrf.mxu0
        %v1225 = vadd.f32 0.0, %v1224
        %v1226 = vpop.f32.mrf.mxu0
        %v1227 = vadd.f32 0.0, %v1226
        %1228 = vmatmul.bf16.gmra.mxu0 %v409
        %v1229 = vpop.f32.mrf.mxu0
        %v1230 = vadd.f32 0.0, %v1229
        %v1231 = vpop.f32.mrf.mxu0
        %v1232 = vadd.f32 0.0, %v1231
        %1233 = vmatmul.bf16.gmra.mxu0 %v410
        %v1234 = vpop.f32.mrf.mxu0
        %v1235 = vadd.f32 0.0, %v1234
        %v1236 = vpop.f32.mrf.mxu0
        %v1237 = vadd.f32 0.0, %v1236
        %1238 = vmatmul.bf16.gmra.mxu0 %v411
        %v1239 = vpop.f32.mrf.mxu0
        %v1240 = vadd.f32 0.0, %v1239
        %v1241 = vpop.f32.mrf.mxu0
        %v1242 = vadd.f32 0.0, %v1241
        %1243 = vmatmul.bf16.gmra.mxu0 %v412
        %v1244 = vpop.f32.mrf.mxu0
        %v1245 = vadd.f32 0.0, %v1244
        %v1246 = vpop.f32.mrf.mxu0
        %v1247 = vadd.f32 0.0, %v1246
        %1248 = vmatmul.bf16.gmra.mxu0 %v413
        %v1249 = vpop.f32.mrf.mxu0
        %v1250 = vadd.f32 0.0, %v1249
        %v1251 = vpop.f32.mrf.mxu0
        %v1252 = vadd.f32 0.0, %v1251
        %1253 = vdwg.mxu0
        %1254 = vst [vmem:[#allocation2] sm:$0xff] %v1195
        %1255 = vst [vmem:[#allocation2 + $0x8] sm:$0xff] %v1197
        %1256 = vst [vmem:[#allocation2 + $0x10] sm:$0xff] %v1200
        %1257 = vst [vmem:[#allocation2 + $0x18] sm:$0xff] %v1202
        %1258 = vst [vmem:[#allocation2 + $0x20] sm:$0xff] %v1205
        %1259 = vst [vmem:[#allocation2 + $0x28] sm:$0xff] %v1207
        %1260 = vst [vmem:[#allocation2 + $0x30] sm:$0xff] %v1210
        %1261 = vst [vmem:[#allocation2 + $0x38] sm:$0xff] %v1212
        %1262 = vst [vmem:[#allocation2 + $0x40] sm:$0xff] %v1215
        %1263 = vst [vmem:[#allocation2 + $0x48] sm:$0xff] %v1217
        %1264 = vst [vmem:[#allocation2 + $0x50] sm:$0xff] %v1220
        %1265 = vst [vmem:[#allocation2 + $0x58] sm:$0xff] %v1222
        %1266 = vst [vmem:[#allocation2 + $0x60] sm:$0xff] %v1225
        %1267 = vst [vmem:[#allocation2 + $0x68] sm:$0xff] %v1227
        %1268 = vst [vmem:[#allocation2 + $0x70] sm:$0xff] %v1230
        %1269 = vst [vmem:[#allocation2 + $0x78] sm:$0xff] %v1232
        %1270 = vst [vmem:[#allocation2 + $0x80] sm:$0xff] %v1235
        %1271 = vst [vmem:[#allocation2 + $0x88] sm:$0xff] %v1237
        %1272 = vst [vmem:[#allocation2 + $0x90] sm:$0xff] %v1240
        %1273 = vst [vmem:[#allocation2 + $0x98] sm:$0xff] %v1242
        %1274 = vst [vmem:[#allocation2 + $0xa0] sm:$0xff] %v1245
        %1275 = vst [vmem:[#allocation2 + $0xa8] sm:$0xff] %v1247
        %1276 = vst [vmem:[#allocation2 + $0xb0] sm:$0xff] %v1250
        %1277 = vst [vmem:[#allocation2 + $0xb8] sm:$0xff] %v1252
        %v1278 = vld [vmem:[#allocation2 + $0x4] sm:$0xff]
        %v1279 = vld [vmem:[#allocation2 + $0xc] sm:$0xff]
        %v1280 = vld [vmem:[#allocation2 + $0x14] sm:$0xff]
        %v1281 = vld [vmem:[#allocation2 + $0x1c] sm:$0xff]
        %v1282 = vld [vmem:[#allocation2 + $0x24] sm:$0xff]
        %v1283 = vld [vmem:[#allocation2 + $0x2c] sm:$0xff]
        %v1284 = vld [vmem:[#allocation2 + $0x34] sm:$0xff]
        %v1285 = vld [vmem:[#allocation2 + $0x3c] sm:$0xff]
        %v1286 = vld [vmem:[#allocation2 + $0x44] sm:$0xff]
        %v1287 = vld [vmem:[#allocation2 + $0x4c] sm:$0xff]
        %v1288 = vld [vmem:[#allocation2 + $0x54] sm:$0xff]
        %v1289 = vld [vmem:[#allocation2 + $0x5c] sm:$0xff]
        %v1290 = vld [vmem:[#allocation2 + $0x64] sm:$0xff]
        %v1291 = vld [vmem:[#allocation2 + $0x6c] sm:$0xff]
        %v1292 = vld [vmem:[#allocation2 + $0x74] sm:$0xff]
        %v1293 = vld [vmem:[#allocation2 + $0x7c] sm:$0xff]
        %v1294 = vld [vmem:[#allocation2 + $0x84] sm:$0xff]
        %v1295 = vld [vmem:[#allocation2 + $0x8c] sm:$0xff]
        %v1296 = vld [vmem:[#allocation2 + $0x94] sm:$0xff]
        %v1297 = vld [vmem:[#allocation2 + $0x9c] sm:$0xff]
        %v1298 = vld [vmem:[#allocation2 + $0xa4] sm:$0xff]
        %v1299 = vld [vmem:[#allocation2 + $0xac] sm:$0xff]
        %v1300 = vld [vmem:[#allocation2 + $0xb4] sm:$0xff]
        %v1301 = vld [vmem:[#allocation2 + $0xbc] sm:$0xff]
        %v1302 = vadd.f32 %v1096, %v1278
        %v1303 = vadd.f32 %v1097, %v1279
        %v1304 = vadd.f32 %v1098, %v1280
        %v1305 = vadd.f32 %v1099, %v1281
        %v1306 = vadd.f32 %v1100, %v1282
        %v1307 = vadd.f32 %v1101, %v1283
        %v1308 = vadd.f32 %v1102, %v1284
        %v1309 = vadd.f32 %v1103, %v1285
        %v1310 = vadd.f32 %v1104, %v1286
        %v1311 = vadd.f32 %v1105, %v1287
        %v1312 = vadd.f32 %v1106, %v1288
        %v1313 = vadd.f32 %v1107, %v1289
        %v1314 = vadd.f32 %v1108, %v1290
        %v1315 = vadd.f32 %v1109, %v1291
        %v1316 = vadd.f32 %v1110, %v1292
        %v1317 = vadd.f32 %v1111, %v1293
        %v1318 = vadd.f32 %v1112, %v1294
        %v1319 = vadd.f32 %v1113, %v1295
        %v1320 = vadd.f32 %v1114, %v1296
        %v1321 = vadd.f32 %v1115, %v1297
        %v1322 = vadd.f32 %v1116, %v1298
        %v1323 = vadd.f32 %v1117, %v1299
        %v1324 = vadd.f32 %v1118, %v1300
        %v1325 = vadd.f32 %v1119, %v1301
        %v1326 = vld [vmem:[#allocation9] sm:$0xff]
        %v1327 = vld [vmem:[#allocation9 + $0x8] sm:$0xff]
        %v1328 = vld [vmem:[#allocation9 + $0x10] sm:$0xff]
        %v1329 = vld [vmem:[#allocation9 + $0x18] sm:$0xff]
        %v1330 = vld [vmem:[#allocation9 + $0x20] sm:$0xff]
        %v1331 = vld [vmem:[#allocation9 + $0x28] sm:$0xff]
        %v1332 = vld [vmem:[#allocation9 + $0x30] sm:$0xff]
        %v1333 = vld [vmem:[#allocation9 + $0x38] sm:$0xff]
        %v1334 = vld [vmem:[#allocation9 + $0x40] sm:$0xff]
        %v1335 = vld [vmem:[#allocation9 + $0x48] sm:$0xff]
        %v1336 = vld [vmem:[#allocation9 + $0x50] sm:$0xff]
        %v1337 = vld [vmem:[#allocation9 + $0x58] sm:$0xff]
        %v1338 = vld [vmem:[#allocation9 + $0x60] sm:$0xff]
        %v1339 = vld [vmem:[#allocation9 + $0x68] sm:$0xff]
        %v1340 = vld [vmem:[#allocation9 + $0x70] sm:$0xff]
        %v1341 = vld [vmem:[#allocation9 + $0x78] sm:$0xff]
        %v1342 = vld [vmem:[#allocation9 + $0x80] sm:$0xff]
        %v1343 = vld [vmem:[#allocation9 + $0x88] sm:$0xff]
        %v1344 = vld [vmem:[#allocation9 + $0x90] sm:$0xff]
        %v1345 = vld [vmem:[#allocation9 + $0x98] sm:$0xff]
        %v1346 = vld [vmem:[#allocation9 + $0xa0] sm:$0xff]
        %v1347 = vld [vmem:[#allocation9 + $0xa8] sm:$0xff]
        %v1348 = vld [vmem:[#allocation9 + $0xb0] sm:$0xff]
        %v1349 = vld [vmem:[#allocation9 + $0xb8] sm:$0xff]
        %v1350 = vadd.f32 %v1302, %v1326
        %v1351 = vadd.f32 %v1303, %v1327
        %v1352 = vadd.f32 %v1304, %v1328
        %v1353 = vadd.f32 %v1305, %v1329
        %v1354 = vadd.f32 %v1306, %v1330
        %v1355 = vadd.f32 %v1307, %v1331
        %v1356 = vadd.f32 %v1308, %v1332
        %v1357 = vadd.f32 %v1309, %v1333
        %v1358 = vadd.f32 %v1310, %v1334
        %v1359 = vadd.f32 %v1311, %v1335
        %v1360 = vadd.f32 %v1312, %v1336
        %v1361 = vadd.f32 %v1313, %v1337
        %v1362 = vadd.f32 %v1314, %v1338
        %v1363 = vadd.f32 %v1315, %v1339
        %v1364 = vadd.f32 %v1316, %v1340
        %v1365 = vadd.f32 %v1317, %v1341
        %v1366 = vadd.f32 %v1318, %v1342
        %v1367 = vadd.f32 %v1319, %v1343
        %v1368 = vadd.f32 %v1320, %v1344
        %v1369 = vadd.f32 %v1321, %v1345
        %v1370 = vadd.f32 %v1322, %v1346
        %v1371 = vadd.f32 %v1323, %v1347
        %v1372 = vadd.f32 %v1324, %v1348
        %v1373 = vadd.f32 %v1325, %v1349
        %1374 = vst [vmem:[#allocation2] sm:$0xff] %v1350
        %1375 = vst [vmem:[#allocation2 + $0x8] sm:$0xff] %v1351
        %1376 = vst [vmem:[#allocation2 + $0x10] sm:$0xff] %v1352
        %1377 = vst [vmem:[#allocation2 + $0x18] sm:$0xff] %v1353
        %1378 = vst [vmem:[#allocation2 + $0x20] sm:$0xff] %v1354
        %1379 = vst [vmem:[#allocation2 + $0x28] sm:$0xff] %v1355
        %1380 = vst [vmem:[#allocation2 + $0x30] sm:$0xff] %v1356
        %1381 = vst [vmem:[#allocation2 + $0x38] sm:$0xff] %v1357
        %1382 = vst [vmem:[#allocation2 + $0x40] sm:$0xff] %v1358
        %1383 = vst [vmem:[#allocation2 + $0x48] sm:$0xff] %v1359
        %1384 = vst [vmem:[#allocation2 + $0x50] sm:$0xff] %v1360
        %1385 = vst [vmem:[#allocation2 + $0x58] sm:$0xff] %v1361
        %1386 = vst [vmem:[#allocation2 + $0x60] sm:$0xff] %v1362
        %1387 = vst [vmem:[#allocation2 + $0x68] sm:$0xff] %v1363
        %1388 = vst [vmem:[#allocation2 + $0x70] sm:$0xff] %v1364
        %1389 = vst [vmem:[#allocation2 + $0x78] sm:$0xff] %v1365
        %1390 = vst [vmem:[#allocation2 + $0x80] sm:$0xff] %v1366
        %1391 = vst [vmem:[#allocation2 + $0x88] sm:$0xff] %v1367
        %1392 = vst [vmem:[#allocation2 + $0x90] sm:$0xff] %v1368
        %1393 = vst [vmem:[#allocation2 + $0x98] sm:$0xff] %v1369
        %1394 = vst [vmem:[#allocation2 + $0xa0] sm:$0xff] %v1370
        %1395 = vst [vmem:[#allocation2 + $0xa8] sm:$0xff] %v1371
        %1396 = vst [vmem:[#allocation2 + $0xb0] sm:$0xff] %v1372
        %1397 = vst [vmem:[#allocation2 + $0xb8] sm:$0xff] %v1373
        %v1398 = vld [vmem:[#allocation2] sm:$0xff]
        %v1399 = vld [vmem:[#allocation2 + $0x8] sm:$0xff]
        %v1400 = vld [vmem:[#allocation2 + $0x10] sm:$0xff]
        %v1401 = vmax.f32 %v1398, %v1399
        %v1402 = vmax.f32 %v1401, %v1400
        %v1403 = vrot.slane %v1402, 4
        %v1404 = vmax.f32 %v1402, %v1403
        %v1405 = vrot.slane %v1404, 2
        %v1406 = vmax.f32 %v1404, %v1405
        %v1407 = vrot.slane %v1406, 1
        %v1408 = vmax.f32 %v1406, %v1407
        %1409 = vst [vmem:[#allocation3] sm:$0x1] %v1408
        %v1410 = vld [vmem:[#allocation2 + $0x18] sm:$0xff]
        %v1411 = vld [vmem:[#allocation2 + $0x20] sm:$0xff]
        %v1412 = vld [vmem:[#allocation2 + $0x28] sm:$0xff]
        %v1413 = vmax.f32 %v1410, %v1411
        %v1414 = vmax.f32 %v1413, %v1412
        %v1415 = vrot.slane %v1414, 4
        %v1416 = vmax.f32 %v1414, %v1415
        %v1417 = vrot.slane %v1416, 2
        %v1418 = vmax.f32 %v1416, %v1417
        %v1419 = vrot.slane %v1418, 1
        %v1420 = vmax.f32 %v1418, %v1419
        %1421 = vst [vmem:[#allocation3 + $0x1] sm:$0x1] %v1420
        %v1422 = vld [vmem:[#allocation2 + $0x30] sm:$0xff]
        %v1423 = vld [vmem:[#allocation2 + $0x38] sm:$0xff]
        %v1424 = vld [vmem:[#allocation2 + $0x40] sm:$0xff]
        %v1425 = vmax.f32 %v1422, %v1423
        %v1426 = vmax.f32 %v1425, %v1424
        %v1427 = vrot.slane %v1426, 4
        %v1428 = vmax.f32 %v1426, %v1427
        %v1429 = vrot.slane %v1428, 2
        %v1430 = vmax.f32 %v1428, %v1429
        %v1431 = vrot.slane %v1430, 1
        %v1432 = vmax.f32 %v1430, %v1431
        %1433 = vst [vmem:[#allocation3 + $0x2] sm:$0x1] %v1432
        %v1434 = vld [vmem:[#allocation2 + $0x48] sm:$0xff]
        %v1435 = vld [vmem:[#allocation2 + $0x50] sm:$0xff]
        %v1436 = vld [vmem:[#allocation2 + $0x58] sm:$0xff]
        %v1437 = vmax.f32 %v1434, %v1435
        %v1438 = vmax.f32 %v1437, %v1436
        %v1439 = vrot.slane %v1438, 4
        %v1440 = vmax.f32 %v1438, %v1439
        %v1441 = vrot.slane %v1440, 2
        %v1442 = vmax.f32 %v1440, %v1441
        %v1443 = vrot.slane %v1442, 1
        %v1444 = vmax.f32 %v1442, %v1443
        %1445 = vst [vmem:[#allocation3 + $0x3] sm:$0x1] %v1444
        %v1446 = vld [vmem:[#allocation2 + $0x60] sm:$0xff]
        %v1447 = vld [vmem:[#allocation2 + $0x68] sm:$0xff]
        %v1448 = vld [vmem:[#allocation2 + $0x70] sm:$0xff]
        %v1449 = vmax.f32 %v1446, %v1447
        %v1450 = vmax.f32 %v1449, %v1448
        %v1451 = vrot.slane %v1450, 4
        %v1452 = vmax.f32 %v1450, %v1451
        %v1453 = vrot.slane %v1452, 2
        %v1454 = vmax.f32 %v1452, %v1453
        %v1455 = vrot.slane %v1454, 1
        %v1456 = vmax.f32 %v1454, %v1455
        %1457 = vst [vmem:[#allocation3 + $0x4] sm:$0x1] %v1456
        %v1458 = vld [vmem:[#allocation2 + $0x78] sm:$0xff]
        %v1459 = vld [vmem:[#allocation2 + $0x80] sm:$0xff]
        %v1460 = vld [vmem:[#allocation2 + $0x88] sm:$0xff]
        %v1461 = vmax.f32 %v1458, %v1459
        %v1462 = vmax.f32 %v1461, %v1460
        %v1463 = vrot.slane %v1462, 4
        %v1464 = vmax.f32 %v1462, %v1463
        %v1465 = vrot.slane %v1464, 2
        %v1466 = vmax.f32 %v1464, %v1465
        %v1467 = vrot.slane %v1466, 1
        %v1468 = vmax.f32 %v1466, %v1467
        %1469 = vst [vmem:[#allocation3 + $0x5] sm:$0x1] %v1468
        %v1470 = vld [vmem:[#allocation2 + $0x90] sm:$0xff]
        %v1471 = vld [vmem:[#allocation2 + $0x98] sm:$0xff]
        %v1472 = vld [vmem:[#allocation2 + $0xa0] sm:$0xff]
        %v1473 = vmax.f32 %v1470, %v1471
        %v1474 = vmax.f32 %v1473, %v1472
        %v1475 = vrot.slane %v1474, 4
        %v1476 = vmax.f32 %v1474, %v1475
        %v1477 = vrot.slane %v1476, 2
        %v1478 = vmax.f32 %v1476, %v1477
        %v1479 = vrot.slane %v1478, 1
        %v1480 = vmax.f32 %v1478, %v1479
        %1481 = vst [vmem:[#allocation3 + $0x6] sm:$0x1] %v1480
        %v1482 = vld [vmem:[#allocation2 + $0xa8] sm:$0xff]
        %v1483 = vld [vmem:[#allocation2 + $0xb0] sm:$0xff]
        %v1484 = vld [vmem:[#allocation2 + $0xb8] sm:$0xff]
        %v1485 = vmax.f32 %v1482, %v1483
        %v1486 = vmax.f32 %v1485, %v1484
        %v1487 = vrot.slane %v1486, 4
        %v1488 = vmax.f32 %v1486, %v1487
        %v1489 = vrot.slane %v1488, 2
        %v1490 = vmax.f32 %v1488, %v1489
        %v1491 = vrot.slane %v1490, 1
        %v1492 = vmax.f32 %v1490, %v1491
        %1493 = vst [vmem:[#allocation3 + $0x7] sm:$0x1] %v1492
        %v1494 = vld [vmem:[#allocation3] sm:$0xff]
        %v1495 = vld [vmem:[#allocation10] sm:$0xff]
        %v1496 = vld [vmem:[#allocation10 + $0x8] sm:$0xff]
        %v1497 = vld [vmem:[#allocation10 + $0x10] sm:$0xff]
        %v1498 = vld [vmem:[#allocation10 + $0x18] sm:$0xff]
        %v1499 = vld [vmem:[#allocation10 + $0x20] sm:$0xff]
        %v1500 = vld [vmem:[#allocation10 + $0x28] sm:$0xff]
        %v1501 = vld [vmem:[#allocation10 + $0x30] sm:$0xff]
        %v1502 = vld [vmem:[#allocation10 + $0x38] sm:$0xff]
        %v1503 = vld [vmem:[#allocation10 + $0x40] sm:$0xff]
        %v1504 = vld [vmem:[#allocation10 + $0x48] sm:$0xff]
        %v1505 = vld [vmem:[#allocation10 + $0x50] sm:$0xff]
        %v1506 = vld [vmem:[#allocation10 + $0x58] sm:$0xff]
        %v1507 = vld [vmem:[#allocation10 + $0x60] sm:$0xff]
        %v1508 = vld [vmem:[#allocation10 + $0x68] sm:$0xff]
        %v1509 = vld [vmem:[#allocation10 + $0x70] sm:$0xff]
        %v1510 = vld [vmem:[#allocation10 + $0x78] sm:$0xff]
        %v1511 = vld [vmem:[%s4] sm:$0x1]
        %v1513 = vperm.slane %v1511, 0
        %1515 = vmatpush.msra.mxu0 %v1510
        %1516 = vmatpush.msra.mxu0 %v1509
        %1517 = vmatpush.msra.mxu0 %v1508
        %1518 = vmatpush.msra.mxu0 %v1507
        %1519 = vmatpush.msra.mxu0 %v1506
        %1520 = vmatpush.msra.mxu0 %v1505
        %1521 = vmatpush.msra.mxu0 %v1504
        %1522 = vmatpush.msra.mxu0 %v1503
        %1523 = vmatpush.msra.mxu0 %v1502
        %1524 = vmatpush.msra.mxu0 %v1501
        %1525 = vmatpush.msra.mxu0 %v1500
        %1526 = vmatpush.msra.mxu0 %v1499
        %1527 = vmatpush.msra.mxu0 %v1498
        %1528 = vmatpush.msra.mxu0 %v1497
        %1529 = vmatpush.msra.mxu0 %v1496
        %1530 = vmatpush.msra.mxu0 %v1495
        %1531 = vmatmul.f32.gmra.mxu0 %v1494
        %v1532 = vpop.f32.mrf.mxu0
        %v1533 = vadd.f32 %v1513, %v1532
        %1534 = vdwg.mxu0
        %1535 = vst [vmem:[%s294] sm:$0xff] %v1533
        %s1536 = sand.u32 %s142, 1
        %s1537 = scalar_lea.sflag [#allocation6], %s1536
        %s1538 = sand.u32 %s142, 1
        %s1539 = smul.addr %s1538, 8
        %s1540 = scalar_lea.vmem [#allocation12], %s1539
        // Predicated region
        $region57: #{tpu_custom_call.1} parent=39 // pred_check
          %p1541 = pneg %p152
        $region58: #{tpu_custom_call.1} parent=39 // pred_check_branch
          %1543 = sbr.rel (%p1541) target = $region60
        $region59: #{tpu_custom_call.1} parent=39 // pred_region
          %1545 = vsyncadd %s1537, 0
          %s1546 = smul.addr %s24, 8
          %s1547 = scalar_lea.hbm %s5, %s1546
          %s1549 = sshll.u32 %s1540, 4
          %s1550 = int_to_ptr.vmem [resolvable:$true] %s1549
          %s1551 = sshll.u32 %s1547, 4
          %s1552 = int_to_ptr.hbm [resolvable:$true] %s1551
          %1554 = dma.vmem_to_hbm [thread:$0]  %s1550, 128, %s1552, %s1537
        $region60: #{tpu_custom_call.1} parent=39 // pred_fallthru
          _
      $region40: #{tpu_custom_call.1} parent=5 // pred_fallthru
        _
      %p1555 = scmp.le.s32.totalorder 2, %s19
      // Predicated region
      $region61: #{tpu_custom_call.1} parent=5 // pred_check
        %p1556 = pneg %p1555
      $region62: #{tpu_custom_call.1} parent=5 // pred_check_branch
        %1558 = sbr.rel (%p1556) target = $region64
      $region63: #{tpu_custom_call.1} parent=5 // pred_region
        %s1559 = ssub.s32 %s19, 2
        // Predicated region
        $region65: #{tpu_custom_call.1} parent=63 // pred_check
          %p1560 = pneg %p158
        $region66: #{tpu_custom_call.1} parent=63 // pred_check_branch
          %1562 = sbr.rel (%p1560) target = $region68
        $region67: #{tpu_custom_call.1} parent=63 // pred_region
          %s1563 = sand.u32 %s143, 1
          %s1564 = scalar_lea.sflag [#allocation6], %s1563
          %s1565 = sand.u32 %s143, 1
          %s1566 = smul.addr %s1565, 8
          %s1567 = scalar_lea.vmem [#allocation12], %s1566
          %1569 = dma.done %s1564, 128
        $region68: #{tpu_custom_call.1} parent=63 // pred_fallthru
          _
      $region64: #{tpu_custom_call.1} parent=5 // pred_fallthru
        _
    $region6: #{tpu_custom_call.1} parent=1 // loop_footer
      %s23 = sadd.s32 1, %s19
    $region7: #{tpu_custom_call.1} parent=1 // loop_footer_branch
      %18 = sbr.rel target = $region3
    $region8: #{tpu_custom_call.1} parent=1 // loop_exit
      _
    %1570 = vsyncpa [#allocation5], 1
    %s1571 = scalar_lea.sflag [#allocation5], 1
    %1572 = vsyncpa %s1571, 1
    %1573 = vsyncpa [#allocation8], 1
    %1574 = vsyncpa [#allocation11], 1
    %1575 = vsyncpa [#allocation6], 1
    %s1576 = scalar_lea.sflag [#allocation6], 1
    %1577 = vsyncpa %s1576, 1

</llo_original>
